<compile_context>
chip_gen: v7x
topology: tpu7x:2x2x1
jax: 0.10.0
libtpu: 0.0.40
codegen_flags: <defaults>
</compile_context>

<pallas_src>
import math

import jax
import jax.numpy as jnp
from jax.experimental import pallas as pl
from jax.experimental.pallas import tpu as pltpu


def _fused_kernel(claim_ref, sent_ref,
                  wq2T_ref, bq2_ref, wkvT_ref, bkv_ref,
                  hsel_ref, hexp_ref, wo2T_ref, bo_ref,
                  w1_ref, b1_ref, w2_ref, b2_ref,
                  out_ref):
    claim = claim_ref[...]                         # (Bt, E)      f32
    sent = sent_ref[...]                           # (Bt*S, E)    f32
    Bt, E = claim.shape
    S = sent.shape[0] // Bt
    E2 = 2 * E

    claim_b = claim.astype(jnp.bfloat16)
    sent_b = sent.astype(jnp.bfloat16)

    # Q projection, zero-padded to 2E lanes -> [q | 0].  Softmax scale
    # (1/sqrt(head_dim)) is pre-folded into Wq/bq at trace time.
    q = jnp.dot(claim_b, wq2T_ref[...],
                preferred_element_type=jnp.float32) + bq2_ref[...]         # (Bt, 2E)
    # Fused K|V projection: one lane-dense matmul -> [k | v].
    kv = jnp.dot(sent_b, wkvT_ref[...],
                 preferred_element_type=jnp.float32) + bkv_ref[...]        # (Bt*S, 2E)

    kv3 = kv.reshape(Bt, S, E2)
    q3 = q.reshape(Bt, 1, E2)

    # Per-head scores: elementwise (q*k | 0), then sum each head's hd lanes via
    # a 0/1 head-select matmul on the MXU (no lane-splitting reshapes).
    prod = (q3 * kv3).reshape(Bt * S, E2)                                  # f32
    scores = jnp.dot(prod.astype(jnp.bfloat16), hsel_ref[...],
                     preferred_element_type=jnp.float32)                   # (Bt*S, H)
    H = scores.shape[-1]
    scores3 = scores.reshape(Bt, S, H)

    # Stable softmax over the S axis, per (batch row, head) — all f32.
    m = jnp.max(scores3, axis=1, keepdims=True)                            # (Bt, 1, H)
    ex = jnp.exp(scores3 - m)                                              # (Bt, S, H)
    denom = jnp.sum(ex, axis=1, keepdims=True)                             # (Bt, 1, H)
    p3 = ex * pl.reciprocal(denom, approx=True)                            # (Bt, S, H)

    # Broadcast each head's softmax weight to its V lanes ([0 | p]) and take
    # the weighted sum of V over S.
    p_exp = jnp.dot(p3.reshape(Bt * S, H).astype(jnp.bfloat16), hexp_ref[...],
                    preferred_element_type=jnp.float32)                    # (Bt*S, 2E)
    ctx = jnp.sum(p_exp.reshape(Bt, S, E2) * kv3, axis=1)                  # (Bt, 2E) = [0 | ctx]

    # Output projection (top half of Wo2T is zeros -> picks the V half of ctx).
    attn = jnp.dot(ctx.astype(jnp.bfloat16), wo2T_ref[...],
                   preferred_element_type=jnp.float32) + bo_ref[...]       # (Bt, E)

    # Feature combine (in-VMEM concat -> single K=4E contraction) + ReLU MLP.
    diff = jnp.abs(claim - attn)
    mult = claim * attn
    combined = jnp.concatenate([claim, attn, diff, mult], axis=-1)         # (Bt, 4E)
    hid = jnp.dot(combined.astype(jnp.bfloat16), w1_ref[...],
                  preferred_element_type=jnp.float32) + b1_ref[...]
    hid = jnp.maximum(hid, 0.0)
    logits = jnp.dot(hid.astype(jnp.bfloat16), w2_ref[...],
                     preferred_element_type=jnp.float32) + b2_ref[...]     # (Bt, Cpad)
    out_ref[...] = logits.astype(out_ref.dtype)


def _round_up(x, m):
    return ((x + m - 1) // m) * m


def sentence_bert_with_attention(claim, sentences, params, *, num_heads):
    B, E = claim.shape
    S = sentences.shape[1]
    H = num_heads
    hd = E // H
    hidden = params["w1"].shape[1]
    C = params["w2"].shape[1]
    E2 = 2 * E
    f32 = jnp.float32
    bf16 = jnp.bfloat16

    # ---- trace-time glue: pre-transpose weights, fold the softmax scale,
    # build padded / merged weight slabs, head-select matrices, flatten
    # sentences, pad batch & output lanes. ----
    scale = 1.0 / math.sqrt(hd)
    zEE = jnp.zeros((E, E), f32)
    zE = jnp.zeros((E,), f32)

    wq2T = jnp.concatenate([params["wq"].T * scale, zEE], axis=1).astype(bf16)   # (E, 2E)
    bq2 = jnp.concatenate([params["bq"] * scale, zE]).reshape(1, E2).astype(f32)
    wkvT = jnp.concatenate([params["wk"].T, params["wv"].T], axis=1).astype(bf16)  # (E, 2E)
    bkv = jnp.concatenate([params["bk"], params["bv"]]).reshape(1, E2).astype(f32)
    wo2T = jnp.concatenate([zEE, params["wo"].T], axis=0).astype(bf16)           # (2E, E)
    bo = params["bo"].reshape(1, E).astype(f32)

    head_id = jnp.arange(E, dtype=jnp.int32) // hd
    hsel_e = (head_id[:, None] == jnp.arange(H, dtype=jnp.int32)[None, :]).astype(f32)  # (E, H)
    hsel = jnp.concatenate([hsel_e, jnp.zeros((E, H), f32)], axis=0).astype(bf16)       # (2E, H)
    hexp = jnp.concatenate([jnp.zeros((H, E), f32), hsel_e.T], axis=1).astype(bf16)     # (H, 2E)

    w1 = params["w1"].astype(bf16)
    b1 = params["b1"].reshape(1, hidden).astype(f32)

    # Lane-dense output: pad num_classes up to a multiple of 128 (sliced later).
    Cpad = _round_up(max(C, 128), 128)
    if Cpad != C:
        w2 = jnp.zeros((hidden, Cpad), f32).at[:, :C].set(params["w2"]).astype(bf16)
        b2 = jnp.zeros((1, Cpad), f32).at[:, :C].set(params["b2"].reshape(1, C))
    else:
        w2 = params["w2"].astype(bf16)
        b2 = params["b2"].reshape(1, C).astype(f32)

    # Batch tiling: Bt always a multiple of 8, tile count chosen to minimise
    # padding, and >= 2 grid steps whenever B > 8 so both v7x TCs get work.
    B8 = _round_up(B, 8)
    if B8 <= 8:
        Bt = B8
    else:
        num_tiles = max(2, pl.cdiv(B8, 128))
        Bt = _round_up(pl.cdiv(B8, num_tiles), 8)
    num_tiles = pl.cdiv(B8, Bt)
    Bpad = num_tiles * Bt

    claim_p = claim
    sent_flat = sentences.reshape(B * S, E)
    if Bpad != B:
        claim_p = jnp.zeros((Bpad, E), claim.dtype).at[:B].set(claim)
        sent_flat = jnp.zeros((Bpad * S, E), sentences.dtype).at[:B * S].set(sent_flat)

    # Resident (constant-index) weights.  At these sizes double-buffering them
    # is negligible VMEM; if E/S are scaled up, single-buffer via
    # pipeline_mode=pl.Buffered(1) and shrink Bt to respect v7x's 64 MiB VMEM.
    const = lambda shape: pl.BlockSpec(shape, lambda i: (0, 0))

    out = pl.pallas_call(
        _fused_kernel,
        out_shape=jax.ShapeDtypeStruct((Bpad, Cpad), claim.dtype),
        grid_spec=pltpu.PrefetchScalarGridSpec(
            num_scalar_prefetch=0,
            grid=(Bpad // Bt,),
            in_specs=[
                pl.BlockSpec((Bt, E), lambda i: (i, 0)),        # claim tile
                pl.BlockSpec((Bt * S, E), lambda i: (i, 0)),    # sentences (flat)
                const((E, E2)), const((1, E2)),                 # Wq (scaled, padded), bq
                const((E, E2)), const((1, E2)),                 # Wk|Wv merged, bkv
                const((E2, H)), const((H, E2)),                 # head select / expand
                const((E2, E)), const((1, E)),                  # Wo (padded), bo
                const((4 * E, hidden)), const((1, hidden)),     # W1, b1
                const((hidden, Cpad)), const((1, Cpad)),        # W2 (padded), b2
            ],
            out_specs=pl.BlockSpec((Bt, Cpad), lambda i: (i, 0)),
        ),
        compiler_params=pltpu.CompilerParams(
            dimension_semantics=("parallel",),
            vmem_limit_bytes=64 * 1024 * 1024),
    )(claim_p, sent_flat, wq2T, bq2, wkvT, bkv, hsel, hexp, wo2T, bo,
      w1, b1, w2, b2)

    return out[:B, :C]


def init_params(key, E, hidden, C):
    ks = jax.random.split(key, 12)

    def w(k, shape, scale=0.05):
        return (scale * jax.random.normal(k, shape)).astype(jnp.float32)

    return dict(
        wq=w(ks[0], (E, E)), bq=w(ks[1], (E,)),
        wk=w(ks[2], (E, E)), bk=w(ks[3], (E,)),
        wv=w(ks[4], (E, E)), bv=w(ks[5], (E,)),
        wo=w(ks[6], (E, E)), bo=w(ks[7], (E,)),
        w1=w(ks[8], (4 * E, hidden)), b1=w(ks[9], (hidden,)),
        w2=w(ks[10], (hidden, C)), b2=w(ks[11], (C,)),
    )


def reference(claim, sent, params, num_heads):
    # Pure-JAX f32 mirror of the PyTorch forward (verification only).
    B, E = claim.shape
    S = sent.shape[1]
    H, hd = num_heads, E // num_heads
    q = claim @ params["wq"].T + params["bq"]
    k = sent @ params["wk"].T + params["bk"]
    v = sent @ params["wv"].T + params["bv"]
    qh = q.reshape(B, H, hd)
    kh = k.reshape(B, S, H, hd)
    vh = v.reshape(B, S, H, hd)
    s = jnp.einsum('bhd,bshd->bhs', qh, kh) / jnp.sqrt(jnp.float32(hd))
    p = jax.nn.softmax(s, axis=-1)
    attn = jnp.einsum('bhs,bshd->bhd', p, vh).reshape(B, E) @ params["wo"].T + params["bo"]
    diff = jnp.abs(claim - attn)
    mult = claim * attn
    comb = jnp.concatenate([claim, attn, diff, mult], axis=-1)
    hid = jax.nn.relu(comb @ params["w1"] + params["b1"])
    return hid @ params["w2"] + params["b2"]


if __name__ == "__main__":
    B, S, E = 2, 8, 64          # batch, num sentences, embedding_dim
    H = 8                        # num_heads (module default) -> head_dim = 8
    hidden, C = 128, 2           # classifier hidden size, num_classes

    key = jax.random.PRNGKey(0)
    k1, k2, k3 = jax.random.split(key, 3)
    claim = jax.random.normal(k1, (B, E), dtype=jnp.float32)
    sentences = jax.random.normal(k2, (B, S, E), dtype=jnp.float32)
    params = init_params(k3, E, hidden, C)

    logits = sentence_bert_with_attention(claim, sentences, params, num_heads=H)
    logits = jax.block_until_ready(logits)

    ref = reference(claim, sentences, params, H)
    assert logits.shape == (B, C)
    if not jnp.allclose(logits, ref, atol=3e-2, rtol=3e-2):
        raise AssertionError(f"mismatch:\nkernel={logits}\nref={ref}")
    print("KERNEL_OK")
</pallas_src>

<mosaic_0001>
module attributes {stable_mosaic.version = 11 : i64} {
  func.func @_fused_kernel(%arg0: i32, %arg1: memref<8x64xf32, #tpu.memory_space<vmem>>, %arg2: memref<64x64xf32, #tpu.memory_space<vmem>>, %arg3: memref<64x128xbf16, #tpu.memory_space<vmem>>, %arg4: memref<1x128xf32, #tpu.memory_space<vmem>>, %arg5: memref<64x128xbf16, #tpu.memory_space<vmem>>, %arg6: memref<1x128xf32, #tpu.memory_space<vmem>>, %arg7: memref<128x8xbf16, #tpu.memory_space<vmem>>, %arg8: memref<8x128xbf16, #tpu.memory_space<vmem>>, %arg9: memref<128x64xbf16, #tpu.memory_space<vmem>>, %arg10: memref<1x64xf32, #tpu.memory_space<vmem>>, %arg11: memref<256x128xbf16, #tpu.memory_space<vmem>>, %arg12: memref<1x128xf32, #tpu.memory_space<vmem>>, %arg13: memref<128x128xbf16, #tpu.memory_space<vmem>>, %arg14: memref<1x128xf32, #tpu.memory_space<vmem>>, %arg15: memref<8x128xf32, #tpu.memory_space<vmem>>) attributes {dimension_semantics = [#tpu.dimension_semantics<parallel>], iteration_bounds = array<i64: 1>, scalar_prefetch = 0 : i64, scratch_operands = 0 : i64, tpu.core_type = #tpu.core_type<tc>, window_params = [{transform_indices = @transform_0, window_bounds = array<i64: 8, 64>}, {transform_indices = @transform_1, window_bounds = array<i64: 64, 64>}, {pipeline_mode = #tpu.pipeline_mode<synchronous>, transform_indices = @transform_2, window_bounds = array<i64: 64, 128>}, {pipeline_mode = #tpu.pipeline_mode<synchronous>, transform_indices = @transform_3, window_bounds = array<i64: 1, 128>}, {pipeline_mode = #tpu.pipeline_mode<synchronous>, transform_indices = @transform_4, window_bounds = array<i64: 64, 128>}, {pipeline_mode = #tpu.pipeline_mode<synchronous>, transform_indices = @transform_5, window_bounds = array<i64: 1, 128>}, {pipeline_mode = #tpu.pipeline_mode<synchronous>, transform_indices = @transform_6, window_bounds = array<i64: 128, 8>}, {pipeline_mode = #tpu.pipeline_mode<synchronous>, transform_indices = @transform_7, window_bounds = array<i64: 8, 128>}, {pipeline_mode = #tpu.pipeline_mode<synchronous>, transform_indices = @transform_8, window_bounds = array<i64: 128, 64>}, {pipeline_mode = #tpu.pipeline_mode<synchronous>, transform_indices = @transform_9, window_bounds = array<i64: 1, 64>}, {pipeline_mode = #tpu.pipeline_mode<synchronous>, transform_indices = @transform_10, window_bounds = array<i64: 256, 128>}, {pipeline_mode = #tpu.pipeline_mode<synchronous>, transform_indices = @transform_11, window_bounds = array<i64: 1, 128>}, {pipeline_mode = #tpu.pipeline_mode<synchronous>, transform_indices = @transform_12, window_bounds = array<i64: 128, 128>}, {pipeline_mode = #tpu.pipeline_mode<synchronous>, transform_indices = @transform_13, window_bounds = array<i64: 1, 128>}, {transform_indices = @transform_14, window_bounds = array<i64: 8, 128>}]} {
    %c0 = arith.constant 0 : index
    %c0_0 = arith.constant 0 : index
    %0 = vector.load %arg1[%c0, %c0_0] : memref<8x64xf32, #tpu.memory_space<vmem>>, vector<8x64xf32>
    %c0_1 = arith.constant 0 : index
    %c0_2 = arith.constant 0 : index
    %1 = vector.load %arg2[%c0_1, %c0_2] : memref<64x64xf32, #tpu.memory_space<vmem>>, vector<64x64xf32>
    %2 = arith.truncf %0 : vector<8x64xf32> to vector<8x64xbf16>
    %3 = arith.truncf %1 : vector<64x64xf32> to vector<64x64xbf16>
    %c0_3 = arith.constant 0 : index
    %c0_4 = arith.constant 0 : index
    %4 = vector.load %arg3[%c0_3, %c0_4] : memref<64x128xbf16, #tpu.memory_space<vmem>>, vector<64x128xbf16>
    %cst = arith.constant dense<0.000000e+00> : vector<8x128xf32>
    %5 = tpu.matmul %2, %4, %cst {dimension_numbers = #tpu.dot_dimension_numbers<[1], [0], [0], [1], [0, 0, 1, 1], [], []>} : vector<8x64xbf16>, vector<64x128xbf16>, vector<8x128xf32> -> vector<8x128xf32>
    %c0_5 = arith.constant 0 : index
    %c0_6 = arith.constant 0 : index
    %6 = vector.load %arg4[%c0_5, %c0_6] : memref<1x128xf32, #tpu.memory_space<vmem>>, vector<1x128xf32>
    %7 = vector.broadcast %6 : vector<1x128xf32> to vector<8x128xf32>
    %8 = arith.addf %5, %7 : vector<8x128xf32>
    %c0_7 = arith.constant 0 : index
    %c0_8 = arith.constant 0 : index
    %9 = vector.load %arg5[%c0_7, %c0_8] : memref<64x128xbf16, #tpu.memory_space<vmem>>, vector<64x128xbf16>
    %cst_9 = arith.constant dense<0.000000e+00> : vector<64x128xf32>
    %10 = tpu.matmul %3, %9, %cst_9 {dimension_numbers = #tpu.dot_dimension_numbers<[1], [0], [0], [1], [0, 0, 1, 1], [], []>} : vector<64x64xbf16>, vector<64x128xbf16>, vector<64x128xf32> -> vector<64x128xf32>
    %c0_10 = arith.constant 0 : index
    %c0_11 = arith.constant 0 : index
    %11 = vector.load %arg6[%c0_10, %c0_11] : memref<1x128xf32, #tpu.memory_space<vmem>>, vector<1x128xf32>
    %12 = vector.broadcast %11 : vector<1x128xf32> to vector<64x128xf32>
    %13 = arith.addf %10, %12 : vector<64x128xf32>
    %14 = vector.shape_cast %13 : vector<64x128xf32> to vector<8x8x128xf32>
    %15 = vector.shape_cast %8 : vector<8x128xf32> to vector<8x1x128xf32>
    %16 = vector.broadcast %15 : vector<8x1x128xf32> to vector<8x8x128xf32>
    %17 = arith.mulf %16, %14 : vector<8x8x128xf32>
    %18 = vector.shape_cast %17 : vector<8x8x128xf32> to vector<64x128xf32>
    %19 = arith.truncf %18 : vector<64x128xf32> to vector<64x128xbf16>
    %c0_12 = arith.constant 0 : index
    %c0_13 = arith.constant 0 : index
    %20 = vector.load %arg7[%c0_12, %c0_13] : memref<128x8xbf16, #tpu.memory_space<vmem>>, vector<128x8xbf16>
    %cst_14 = arith.constant dense<0.000000e+00> : vector<64x8xf32>
    %21 = tpu.matmul %19, %20, %cst_14 {dimension_numbers = #tpu.dot_dimension_numbers<[1], [0], [0], [1], [0, 0, 1, 1], [], []>} : vector<64x128xbf16>, vector<128x8xbf16>, vector<64x8xf32> -> vector<64x8xf32>
    %22 = vector.shape_cast %21 : vector<64x8xf32> to vector<8x8x8xf32>
    %cst_15 = arith.constant dense<0xFF800000> : vector<8x8xf32>
    %23 = vector.multi_reduction <maximumf>, %22, %cst_15 [1] : vector<8x8x8xf32> to vector<8x8xf32>
    %24 = vector.shape_cast %23 : vector<8x8xf32> to vector<8x1x8xf32>
    %25 = vector.broadcast %24 : vector<8x1x8xf32> to vector<8x8x8xf32>
    %26 = arith.subf %22, %25 : vector<8x8x8xf32>
    %27 = math.exp %26 : vector<8x8x8xf32>
    %cst_16 = arith.constant dense<0.000000e+00> : vector<8x8xf32>
    %28 = vector.multi_reduction <add>, %27, %cst_16 [1] : vector<8x8x8xf32> to vector<8x8xf32>
    %29 = vector.shape_cast %28 : vector<8x8xf32> to vector<8x1x8xf32>
    %30 = tpu.reciprocal %29 {approx = true} : vector<8x1x8xf32> -> vector<8x1x8xf32>
    %31 = vector.broadcast %30 : vector<8x1x8xf32> to vector<8x8x8xf32>
    %32 = arith.mulf %27, %31 : vector<8x8x8xf32>
    %33 = vector.shape_cast %32 : vector<8x8x8xf32> to vector<64x8xf32>
    %34 = arith.truncf %33 : vector<64x8xf32> to vector<64x8xbf16>
    %c0_17 = arith.constant 0 : index
    %c0_18 = arith.constant 0 : index
    %35 = vector.load %arg8[%c0_17, %c0_18] : memref<8x128xbf16, #tpu.memory_space<vmem>>, vector<8x128xbf16>
    %cst_19 = arith.constant dense<0.000000e+00> : vector<64x128xf32>
    %36 = tpu.matmul %34, %35, %cst_19 {dimension_numbers = #tpu.dot_dimension_numbers<[1], [0], [0], [1], [0, 0, 1, 1], [], []>} : vector<64x8xbf16>, vector<8x128xbf16>, vector<64x128xf32> -> vector<64x128xf32>
    %37 = vector.shape_cast %36 : vector<64x128xf32> to vector<8x8x128xf32>
    %38 = arith.mulf %37, %14 : vector<8x8x128xf32>
    %cst_20 = arith.constant dense<0.000000e+00> : vector<8x128xf32>
    %39 = vector.multi_reduction <add>, %38, %cst_20 [1] : vector<8x8x128xf32> to vector<8x128xf32>
    %40 = arith.truncf %39 : vector<8x128xf32> to vector<8x128xbf16>
    %c0_21 = arith.constant 0 : index
    %c0_22 = arith.constant 0 : index
    %41 = vector.load %arg9[%c0_21, %c0_22] : memref<128x64xbf16, #tpu.memory_space<vmem>>, vector<128x64xbf16>
    %cst_23 = arith.constant dense<0.000000e+00> : vector<8x64xf32>
    %42 = tpu.matmul %40, %41, %cst_23 {dimension_numbers = #tpu.dot_dimension_numbers<[1], [0], [0], [1], [0, 0, 1, 1], [], []>} : vector<8x128xbf16>, vector<128x64xbf16>, vector<8x64xf32> -> vector<8x64xf32>
    %c0_24 = arith.constant 0 : index
    %c0_25 = arith.constant 0 : index
    %43 = vector.load %arg10[%c0_24, %c0_25] : memref<1x64xf32, #tpu.memory_space<vmem>>, vector<1x64xf32>
    %44 = vector.broadcast %43 : vector<1x64xf32> to vector<8x64xf32>
    %45 = arith.addf %42, %44 : vector<8x64xf32>
    %46 = arith.subf %0, %45 : vector<8x64xf32>
    %47 = math.absf %46 : vector<8x64xf32>
    %48 = arith.mulf %0, %45 : vector<8x64xf32>
    %49 = tpu.concatenate %0, %45, %47, %48 in 1 : vector<8x64xf32>, vector<8x64xf32>, vector<8x64xf32>, vector<8x64xf32> -> vector<8x256xf32>
    %50 = arith.truncf %49 : vector<8x256xf32> to vector<8x256xbf16>
    %c0_26 = arith.constant 0 : index
    %c0_27 = arith.constant 0 : index
    %51 = vector.load %arg11[%c0_26, %c0_27] : memref<256x128xbf16, #tpu.memory_space<vmem>>, vector<256x128xbf16>
    %cst_28 = arith.constant dense<0.000000e+00> : vector<8x128xf32>
    %52 = tpu.matmul %50, %51, %cst_28 {dimension_numbers = #tpu.dot_dimension_numbers<[1], [0], [0], [1], [0, 0, 1, 1], [], []>} : vector<8x256xbf16>, vector<256x128xbf16>, vector<8x128xf32> -> vector<8x128xf32>
    %c0_29 = arith.constant 0 : index
    %c0_30 = arith.constant 0 : index
    %53 = vector.load %arg12[%c0_29, %c0_30] : memref<1x128xf32, #tpu.memory_space<vmem>>, vector<1x128xf32>
    %54 = vector.broadcast %53 : vector<1x128xf32> to vector<8x128xf32>
    %55 = arith.addf %52, %54 : vector<8x128xf32>
    %cst_31 = arith.constant 0.000000e+00 : f32
    %56 = vector.broadcast %cst_31 : f32 to vector<8x128xf32>
    %57 = arith.maximumf %55, %56 : vector<8x128xf32>
    %58 = arith.truncf %57 : vector<8x128xf32> to vector<8x128xbf16>
    %c0_32 = arith.constant 0 : index
    %c0_33 = arith.constant 0 : index
    %59 = vector.load %arg13[%c0_32, %c0_33] : memref<128x128xbf16, #tpu.memory_space<vmem>>, vector<128x128xbf16>
    %cst_34 = arith.constant dense<0.000000e+00> : vector<8x128xf32>
    %60 = tpu.matmul %58, %59, %cst_34 {dimension_numbers = #tpu.dot_dimension_numbers<[1], [0], [0], [1], [0, 0, 1, 1], [], []>} : vector<8x128xbf16>, vector<128x128xbf16>, vector<8x128xf32> -> vector<8x128xf32>
    %c0_35 = arith.constant 0 : index
    %c0_36 = arith.constant 0 : index
    %61 = vector.load %arg14[%c0_35, %c0_36] : memref<1x128xf32, #tpu.memory_space<vmem>>, vector<1x128xf32>
    %62 = vector.broadcast %61 : vector<1x128xf32> to vector<8x128xf32>
    %63 = arith.addf %60, %62 : vector<8x128xf32>
    %c0_37 = arith.constant 0 : index
    %c0_38 = arith.constant 0 : index
    %64 = vector.load %arg15[%c0_37, %c0_38] : memref<8x128xf32, #tpu.memory_space<vmem>>, vector<8x128xf32>
    tpu.vector_store %arg15[%c0_37, %c0_38], %63 {strides = array<i32>} : memref<8x128xf32, #tpu.memory_space<vmem>>, vector<8x128xf32>,
    return
  }
  func.func @transform_0(%arg0: i32) -> (i32, i32) {
    %c0_i32 = arith.constant 0 : i32
    %c0_i32_0 = arith.constant 0 : i32
    return %arg0, %c0_i32 : i32, i32
  }
  func.func @transform_1(%arg0: i32) -> (i32, i32) {
    %c0_i32 = arith.constant 0 : i32
    %c0_i32_0 = arith.constant 0 : i32
    return %arg0, %c0_i32 : i32, i32
  }
  func.func @transform_2(%arg0: i32) -> (i32, i32) {
    %c0_i32 = arith.constant 0 : i32
    %c0_i32_0 = arith.constant 0 : i32
    %c0_i32_1 = arith.constant 0 : i32
    return %c0_i32, %c0_i32_0 : i32, i32
  }
  func.func @transform_3(%arg0: i32) -> (i32, i32) {
    %c0_i32 = arith.constant 0 : i32
    %c0_i32_0 = arith.constant 0 : i32
    %c0_i32_1 = arith.constant 0 : i32
    return %c0_i32, %c0_i32_0 : i32, i32
  }
  func.func @transform_4(%arg0: i32) -> (i32, i32) {
    %c0_i32 = arith.constant 0 : i32
    %c0_i32_0 = arith.constant 0 : i32
    %c0_i32_1 = arith.constant 0 : i32
    return %c0_i32, %c0_i32_0 : i32, i32
  }
  func.func @transform_5(%arg0: i32) -> (i32, i32) {
    %c0_i32 = arith.constant 0 : i32
    %c0_i32_0 = arith.constant 0 : i32
    %c0_i32_1 = arith.constant 0 : i32
    return %c0_i32, %c0_i32_0 : i32, i32
  }
  func.func @transform_6(%arg0: i32) -> (i32, i32) {
    %c0_i32 = arith.constant 0 : i32
    %c0_i32_0 = arith.constant 0 : i32
    %c0_i32_1 = arith.constant 0 : i32
    return %c0_i32, %c0_i32_0 : i32, i32
  }
  func.func @transform_7(%arg0: i32) -> (i32, i32) {
    %c0_i32 = arith.constant 0 : i32
    %c0_i32_0 = arith.constant 0 : i32
    %c0_i32_1 = arith.constant 0 : i32
    return %c0_i32, %c0_i32_0 : i32, i32
  }
  func.func @transform_8(%arg0: i32) -> (i32, i32) {
    %c0_i32 = arith.constant 0 : i32
    %c0_i32_0 = arith.constant 0 : i32
    %c0_i32_1 = arith.constant 0 : i32
    return %c0_i32, %c0_i32_0 : i32, i32
  }
  func.func @transform_9(%arg0: i32) -> (i32, i32) {
    %c0_i32 = arith.constant 0 : i32
    %c0_i32_0 = arith.constant 0 : i32
    %c0_i32_1 = arith.constant 0 : i32
    return %c0_i32, %c0_i32_0 : i32, i32
  }
  func.func @transform_10(%arg0: i32) -> (i32, i32) {
    %c0_i32 = arith.constant 0 : i32
    %c0_i32_0 = arith.constant 0 : i32
    %c0_i32_1 = arith.constant 0 : i32
    return %c0_i32, %c0_i32_0 : i32, i32
  }
  func.func @transform_11(%arg0: i32) -> (i32, i32) {
    %c0_i32 = arith.constant 0 : i32
    %c0_i32_0 = arith.constant 0 : i32
    %c0_i32_1 = arith.constant 0 : i32
    return %c0_i32, %c0_i32_0 : i32, i32
  }
  func.func @transform_12(%arg0: i32) -> (i32, i32) {
    %c0_i32 = arith.constant 0 : i32
    %c0_i32_0 = arith.constant 0 : i32
    %c0_i32_1 = arith.constant 0 : i32
    return %c0_i32, %c0_i32_0 : i32, i32
  }
  func.func @transform_13(%arg0: i32) -> (i32, i32) {
    %c0_i32 = arith.constant 0 : i32
    %c0_i32_0 = arith.constant 0 : i32
    %c0_i32_1 = arith.constant 0 : i32
    return %c0_i32, %c0_i32_0 : i32, i32
  }
  func.func @transform_14(%arg0: i32) -> (i32, i32) {
    %c0_i32 = arith.constant 0 : i32
    %c0_i32_0 = arith.constant 0 : i32
    return %arg0, %c0_i32 : i32, i32
  }
}

</mosaic_0001>

<llo_original>
// kernel: tpu_custom_call.1
$region0: #{tpu_custom_call.1}
  #allocation0 [shape = 'u32[]', space=smem, size = 0x4, offset = 0x4, fixed_abs, tag = 'smem constant byte address 0x4 - core index']
  #allocation1 [shape = 'u32[144,128]{1,0:T(1,128)}', space=vmem, size = 0x12000, scoped, tag = 'internal scratch']
  %s0 = inlined_call_operand.hbm [shape: f32[8,64], index: 0, kind: input, shape index: {}]
  %s1 = inlined_call_operand.hbm [shape: f32[64,64], index: 1, kind: input, shape index: {}]
  %s2 = inlined_call_operand.hbm [shape: bf16[64,128], index: 2, kind: input, shape index: {}]
  %s3 = inlined_call_operand.hbm [shape: f32[1,128], index: 3, kind: input, shape index: {}]
  %s4 = inlined_call_operand.hbm [shape: bf16[64,128], index: 4, kind: input, shape index: {}]
  %s5 = inlined_call_operand.hbm [shape: f32[1,128], index: 5, kind: input, shape index: {}]
  %s6 = inlined_call_operand.hbm [shape: bf16[128,8], index: 6, kind: input, shape index: {}]
  %s7 = inlined_call_operand.hbm [shape: bf16[8,128], index: 7, kind: input, shape index: {}]
  %s8 = inlined_call_operand.hbm [shape: bf16[128,64], index: 8, kind: input, shape index: {}]
  %s9 = inlined_call_operand.hbm [shape: f32[1,64], index: 9, kind: input, shape index: {}]
  %s10 = inlined_call_operand.hbm [shape: bf16[256,128], index: 10, kind: input, shape index: {}]
  %s11 = inlined_call_operand.hbm [shape: f32[1,128], index: 11, kind: input, shape index: {}]
  %s12 = inlined_call_operand.hbm [shape: bf16[128,128], index: 12, kind: input, shape index: {}]
  %s13 = inlined_call_operand.hbm [shape: f32[1,128], index: 13, kind: input, shape index: {}]
  %s14 = inlined_call_operand.hbm [shape: f32[8,128], index: 14, kind: output, shape index: {}]
  %s15 = sld [smem:[#allocation0]]
  $region122: #{tpu_custom_call.1} parent=0
    _
  %s17 = ssub.s32 1, %s15
  %s18 = scalar_select 0, %s17, %s15
  $region1: #{tpu_custom_call.1} parent=0
    #allocation2 [shape = 'u8[4096]{0}', space=vmem, size = 0x1000, scoped, tag = 'input window, operand 0, single buffered']
    #allocation3 [shape = 's32[1]{0}', space=sflag, size = 0x4, scoped, tag = 'scoped memory for tpu_custom_call.1']
    #allocation4 [shape = 's32[1]{0}', space=sflag, size = 0x4, scoped, tag = 'scoped memory for tpu_custom_call.1']
    #allocation5 [shape = 'u8[32768]{0}', space=vmem, size = 0x8000, scoped, tag = 'input window, operand 1, single buffered']
    #allocation6 [shape = 's32[1]{0}', space=sflag, size = 0x4, scoped, tag = 'scoped memory for tpu_custom_call.1']
    #allocation7 [shape = 'u8[16384]{0}', space=vmem, size = 0x4000, scoped, tag = 'input window, operand 2, single buffered']
    #allocation8 [shape = 'u8[512]{0}', space=vmem, size = 0x400, scoped, tag = 'input window, operand 3, single buffered']
    #allocation9 [shape = 's32[1]{0}', space=sflag, size = 0x4, scoped, tag = 'scoped memory for tpu_custom_call.1']
    #allocation10 [shape = 'u8[16384]{0}', space=vmem, size = 0x4000, scoped, tag = 'input window, operand 4, single buffered']
    #allocation11 [shape = 'u8[512]{0}', space=vmem, size = 0x400, scoped, tag = 'input window, operand 5, single buffered']
    #allocation12 [shape = 's32[1]{0}', space=sflag, size = 0x4, scoped, tag = 'scoped memory for tpu_custom_call.1']
    #allocation13 [shape = 'u8[32768]{0}', space=vmem, size = 0x8000, scoped, tag = 'input window, operand 6, single buffered']
    #allocation14 [shape = 'u8[2048]{0}', space=vmem, size = 0x800, scoped, tag = 'input window, operand 7, single buffered']
    #allocation15 [shape = 's32[1]{0}', space=sflag, size = 0x4, scoped, tag = 'scoped memory for tpu_custom_call.1']
    #allocation16 [shape = 'u8[32768]{0}', space=vmem, size = 0x8000, scoped, tag = 'input window, operand 8, single buffered']
    #allocation17 [shape = 'u8[512]{0}', space=vmem, size = 0x400, scoped, tag = 'input window, operand 9, single buffered']
    #allocation18 [shape = 's32[1]{0}', space=sflag, size = 0x4, scoped, tag = 'scoped memory for tpu_custom_call.1']
    #allocation19 [shape = 'u8[65536]{0}', space=vmem, size = 0x10000, scoped, tag = 'input window, operand 10, single buffered']
    #allocation20 [shape = 'u8[512]{0}', space=vmem, size = 0x400, scoped, tag = 'input window, operand 11, single buffered']
    #allocation21 [shape = 's32[1]{0}', space=sflag, size = 0x4, scoped, tag = 'scoped memory for tpu_custom_call.1']
    #allocation22 [shape = 'u8[32768]{0}', space=vmem, size = 0x8000, scoped, tag = 'input window, operand 12, single buffered']
    #allocation23 [shape = 'u8[512]{0}', space=vmem, size = 0x400, scoped, tag = 'input window, operand 13, single buffered']
    #allocation24 [shape = 's32[1]{0}', space=sflag, size = 0x4, scoped, tag = 'scoped memory for tpu_custom_call.1']
    #allocation25 [shape = 'u8[4096]{0}', space=vmem, size = 0x1000, scoped, tag = 'output window, operand 0, single buffered']
    %19 = vsyncpa [#allocation3], 0
    %20 = vsyncpa [#allocation6], 0
    %21 = vsyncpa [#allocation9], 0
    %22 = vsyncpa [#allocation12], 0
    %23 = vsyncpa [#allocation15], 0
    %24 = vsyncpa [#allocation18], 0
    %25 = vsyncpa [#allocation21], 0
    %26 = vsyncpa [#allocation24], 0
    %27 = vsyncpa [#allocation4], 0
    // Predicated region
    $region2: #{tpu_custom_call.1} parent=1 // pred_check
      _
    $region3: #{tpu_custom_call.1} parent=1 // pred_check_branch
      %29 = sbr.rel (0) target = $region5
    $region4: #{tpu_custom_call.1} parent=1 // pred_region
      %s31 = ssub.s32 128, 128
      %32 = vsyncadd [#allocation3], %s31
      %s34 = sshll.u32 [#allocation2], 4
      %s35 = int_to_ptr.vmem [resolvable:$true] %s34
      %37 = dma.hbm_to_vmem [thread:$0]  %s0, 128, %s35, [#allocation3]
    $region5: #{tpu_custom_call.1} parent=1 // pred_fallthru
      _
    // Predicated region
    $region6: #{tpu_custom_call.1} parent=1 // pred_check
      _
    $region7: #{tpu_custom_call.1} parent=1 // pred_check_branch
      %39 = sbr.rel (0) target = $region9
    $region8: #{tpu_custom_call.1} parent=1 // pred_region
      %s41 = ssub.s32 1024, 1024
      %42 = vsyncadd [#allocation6], %s41
      %s43 = sshll.u32 [#allocation5], 4
      %s44 = int_to_ptr.vmem [resolvable:$true] %s43
      %49 = dma.hbm_to_vmem [thread:$0]  %s1, 1024, %s44, [#allocation6], 128, 128, 8
    $region9: #{tpu_custom_call.1} parent=1 // pred_fallthru
      _
    // Predicated region
    $region10: #{tpu_custom_call.1} parent=1 // pred_check
      _
    $region11: #{tpu_custom_call.1} parent=1 // pred_check_branch
      %51 = sbr.rel (0) target = $region13
    $region12: #{tpu_custom_call.1} parent=1 // pred_region
      %s53 = ssub.s32 512, 512
      %54 = vsyncadd [#allocation6], %s53
      %s55 = sshll.u32 [#allocation7], 4
      %s56 = int_to_ptr.vmem [resolvable:$true] %s55
      %61 = dma.hbm_to_vmem [thread:$0]  %s2, 512, %s56, [#allocation6], 64, 64, 4
    $region13: #{tpu_custom_call.1} parent=1 // pred_fallthru
      _
    // Predicated region
    $region14: #{tpu_custom_call.1} parent=1 // pred_check
      _
    $region15: #{tpu_custom_call.1} parent=1 // pred_check_branch
      %63 = sbr.rel (0) target = $region17
    $region16: #{tpu_custom_call.1} parent=1 // pred_region
      %s65 = ssub.s32 16, 16
      %66 = vsyncadd [#allocation9], %s65
      %s68 = sshll.u32 [#allocation8], 4
      %s69 = int_to_ptr.vmem [resolvable:$true] %s68
      %71 = dma.hbm_to_vmem [thread:$0]  %s3, 16, %s69, [#allocation9]
    $region17: #{tpu_custom_call.1} parent=1 // pred_fallthru
      _
    // Predicated region
    $region18: #{tpu_custom_call.1} parent=1 // pred_check
      _
    $region19: #{tpu_custom_call.1} parent=1 // pred_check_branch
      %73 = sbr.rel (0) target = $region21
    $region20: #{tpu_custom_call.1} parent=1 // pred_region
      %s75 = ssub.s32 512, 512
      %76 = vsyncadd [#allocation9], %s75
      %s77 = sshll.u32 [#allocation10], 4
      %s78 = int_to_ptr.vmem [resolvable:$true] %s77
      %83 = dma.hbm_to_vmem [thread:$0]  %s4, 512, %s78, [#allocation9], 64, 64, 4
    $region21: #{tpu_custom_call.1} parent=1 // pred_fallthru
      _
    // Predicated region
    $region22: #{tpu_custom_call.1} parent=1 // pred_check
      _
    $region23: #{tpu_custom_call.1} parent=1 // pred_check_branch
      %85 = sbr.rel (0) target = $region25
    $region24: #{tpu_custom_call.1} parent=1 // pred_region
      %s87 = ssub.s32 16, 16
      %88 = vsyncadd [#allocation12], %s87
      %s90 = sshll.u32 [#allocation11], 4
      %s91 = int_to_ptr.vmem [resolvable:$true] %s90
      %93 = dma.hbm_to_vmem [thread:$0]  %s5, 16, %s91, [#allocation12]
    $region25: #{tpu_custom_call.1} parent=1 // pred_fallthru
      _
    // Predicated region
    $region26: #{tpu_custom_call.1} parent=1 // pred_check
      _
    $region27: #{tpu_custom_call.1} parent=1 // pred_check_branch
      %95 = sbr.rel (0) target = $region29
    $region28: #{tpu_custom_call.1} parent=1 // pred_region
      %s97 = ssub.s32 1024, 1024
      %98 = vsyncadd [#allocation12], %s97
      %s99 = sshll.u32 [#allocation13], 4
      %s100 = int_to_ptr.vmem [resolvable:$true] %s99
      %105 = dma.hbm_to_vmem [thread:$0]  %s6, 1024, %s100, [#allocation12], 64, 64, 4
    $region29: #{tpu_custom_call.1} parent=1 // pred_fallthru
      _
    // Predicated region
    $region30: #{tpu_custom_call.1} parent=1 // pred_check
      _
    $region31: #{tpu_custom_call.1} parent=1 // pred_check_branch
      %107 = sbr.rel (0) target = $region33
    $region32: #{tpu_custom_call.1} parent=1 // pred_region
      %s109 = ssub.s32 64, 64
      %110 = vsyncadd [#allocation15], %s109
      %s112 = sshll.u32 [#allocation14], 4
      %s113 = int_to_ptr.vmem [resolvable:$true] %s112
      %115 = dma.hbm_to_vmem [thread:$0]  %s7, 64, %s113, [#allocation15]
    $region33: #{tpu_custom_call.1} parent=1 // pred_fallthru
      _
    // Predicated region
    $region34: #{tpu_custom_call.1} parent=1 // pred_check
      _
    $region35: #{tpu_custom_call.1} parent=1 // pred_check_branch
      %117 = sbr.rel (0) target = $region37
    $region36: #{tpu_custom_call.1} parent=1 // pred_region
      %s119 = ssub.s32 1024, 1024
      %120 = vsyncadd [#allocation15], %s119
      %s121 = sshll.u32 [#allocation16], 4
      %s122 = int_to_ptr.vmem [resolvable:$true] %s121
      %127 = dma.hbm_to_vmem [thread:$0]  %s8, 1024, %s122, [#allocation15], 64, 64, 4
    $region37: #{tpu_custom_call.1} parent=1 // pred_fallthru
      _
    // Predicated region
    $region38: #{tpu_custom_call.1} parent=1 // pred_check
      _
    $region39: #{tpu_custom_call.1} parent=1 // pred_check_branch
      %129 = sbr.rel (0) target = $region41
    $region40: #{tpu_custom_call.1} parent=1 // pred_region
      %s131 = ssub.s32 16, 16
      %132 = vsyncadd [#allocation18], %s131
      %s134 = sshll.u32 [#allocation17], 4
      %s135 = int_to_ptr.vmem [resolvable:$true] %s134
      %137 = dma.hbm_to_vmem [thread:$0]  %s9, 16, %s135, [#allocation18]
    $region41: #{tpu_custom_call.1} parent=1 // pred_fallthru
      _
    // Predicated region
    $region42: #{tpu_custom_call.1} parent=1 // pred_check
      _
    $region43: #{tpu_custom_call.1} parent=1 // pred_check_branch
      %139 = sbr.rel (0) target = $region45
    $region44: #{tpu_custom_call.1} parent=1 // pred_region
      %s141 = ssub.s32 2048, 2048
      %142 = vsyncadd [#allocation18], %s141
      %s143 = sshll.u32 [#allocation19], 4
      %s144 = int_to_ptr.vmem [resolvable:$true] %s143
      %149 = dma.hbm_to_vmem [thread:$0]  %s10, 2048, %s144, [#allocation18], 64, 64, 4
    $region45: #{tpu_custom_call.1} parent=1 // pred_fallthru
      _
    // Predicated region
    $region46: #{tpu_custom_call.1} parent=1 // pred_check
      _
    $region47: #{tpu_custom_call.1} parent=1 // pred_check_branch
      %151 = sbr.rel (0) target = $region49
    $region48: #{tpu_custom_call.1} parent=1 // pred_region
      %s153 = ssub.s32 16, 16
      %154 = vsyncadd [#allocation21], %s153
      %s156 = sshll.u32 [#allocation20], 4
      %s157 = int_to_ptr.vmem [resolvable:$true] %s156
      %159 = dma.hbm_to_vmem [thread:$0]  %s11, 16, %s157, [#allocation21]
    $region49: #{tpu_custom_call.1} parent=1 // pred_fallthru
      _
    // Predicated region
    $region50: #{tpu_custom_call.1} parent=1 // pred_check
      _
    $region51: #{tpu_custom_call.1} parent=1 // pred_check_branch
      %161 = sbr.rel (0) target = $region53
    $region52: #{tpu_custom_call.1} parent=1 // pred_region
      %s163 = ssub.s32 1024, 1024
      %164 = vsyncadd [#allocation21], %s163
      %s165 = sshll.u32 [#allocation22], 4
      %s166 = int_to_ptr.vmem [resolvable:$true] %s165
      %171 = dma.hbm_to_vmem [thread:$0]  %s12, 1024, %s166, [#allocation21], 64, 64, 4
    $region53: #{tpu_custom_call.1} parent=1 // pred_fallthru
      _
    // Predicated region
    $region54: #{tpu_custom_call.1} parent=1 // pred_check
      _
    $region55: #{tpu_custom_call.1} parent=1 // pred_check_branch
      %173 = sbr.rel (0) target = $region57
    $region56: #{tpu_custom_call.1} parent=1 // pred_region
      %s175 = ssub.s32 16, 16
      %176 = vsyncadd [#allocation24], %s175
      %s178 = sshll.u32 [#allocation23], 4
      %s179 = int_to_ptr.vmem [resolvable:$true] %s178
      %181 = dma.hbm_to_vmem [thread:$0]  %s13, 16, %s179, [#allocation24]
    $region57: #{tpu_custom_call.1} parent=1 // pred_fallthru
      _
    // Predicated region
    $region58: #{tpu_custom_call.1} parent=1 // pred_check
      _
    $region59: #{tpu_custom_call.1} parent=1 // pred_check_branch
      %183 = sbr.rel (0) target = $region61
    $region60: #{tpu_custom_call.1} parent=1 // pred_region
      %184 = dma.done [#allocation3], 128
    $region61: #{tpu_custom_call.1} parent=1 // pred_fallthru
      _
    // Predicated region
    $region62: #{tpu_custom_call.1} parent=1 // pred_check
      _
    $region63: #{tpu_custom_call.1} parent=1 // pred_check_branch
      %186 = sbr.rel (0) target = $region65
    $region64: #{tpu_custom_call.1} parent=1 // pred_region
      %187 = dma.done [#allocation6], 1024
    $region65: #{tpu_custom_call.1} parent=1 // pred_fallthru
      _
    // Predicated region
    $region66: #{tpu_custom_call.1} parent=1 // pred_check
      _
    $region67: #{tpu_custom_call.1} parent=1 // pred_check_branch
      %189 = sbr.rel (0) target = $region69
    $region68: #{tpu_custom_call.1} parent=1 // pred_region
      %190 = dma.done [#allocation6], 512
    $region69: #{tpu_custom_call.1} parent=1 // pred_fallthru
      _
    // Predicated region
    $region70: #{tpu_custom_call.1} parent=1 // pred_check
      _
    $region71: #{tpu_custom_call.1} parent=1 // pred_check_branch
      %192 = sbr.rel (0) target = $region73
    $region72: #{tpu_custom_call.1} parent=1 // pred_region
      %193 = dma.done [#allocation9], 16
    $region73: #{tpu_custom_call.1} parent=1 // pred_fallthru
      _
    // Predicated region
    $region74: #{tpu_custom_call.1} parent=1 // pred_check
      _
    $region75: #{tpu_custom_call.1} parent=1 // pred_check_branch
      %195 = sbr.rel (0) target = $region77
    $region76: #{tpu_custom_call.1} parent=1 // pred_region
      %196 = dma.done [#allocation9], 512
    $region77: #{tpu_custom_call.1} parent=1 // pred_fallthru
      _
    // Predicated region
    $region78: #{tpu_custom_call.1} parent=1 // pred_check
      _
    $region79: #{tpu_custom_call.1} parent=1 // pred_check_branch
      %198 = sbr.rel (0) target = $region81
    $region80: #{tpu_custom_call.1} parent=1 // pred_region
      %199 = dma.done [#allocation12], 16
    $region81: #{tpu_custom_call.1} parent=1 // pred_fallthru
      _
    // Predicated region
    $region82: #{tpu_custom_call.1} parent=1 // pred_check
      _
    $region83: #{tpu_custom_call.1} parent=1 // pred_check_branch
      %201 = sbr.rel (0) target = $region85
    $region84: #{tpu_custom_call.1} parent=1 // pred_region
      %202 = dma.done [#allocation12], 1024
    $region85: #{tpu_custom_call.1} parent=1 // pred_fallthru
      _
    // Predicated region
    $region86: #{tpu_custom_call.1} parent=1 // pred_check
      _
    $region87: #{tpu_custom_call.1} parent=1 // pred_check_branch
      %204 = sbr.rel (0) target = $region89
    $region88: #{tpu_custom_call.1} parent=1 // pred_region
      %205 = dma.done [#allocation15], 64
    $region89: #{tpu_custom_call.1} parent=1 // pred_fallthru
      _
    // Predicated region
    $region90: #{tpu_custom_call.1} parent=1 // pred_check
      _
    $region91: #{tpu_custom_call.1} parent=1 // pred_check_branch
      %207 = sbr.rel (0) target = $region93
    $region92: #{tpu_custom_call.1} parent=1 // pred_region
      %208 = dma.done [#allocation15], 1024
    $region93: #{tpu_custom_call.1} parent=1 // pred_fallthru
      _
    // Predicated region
    $region94: #{tpu_custom_call.1} parent=1 // pred_check
      _
    $region95: #{tpu_custom_call.1} parent=1 // pred_check_branch
      %210 = sbr.rel (0) target = $region97
    $region96: #{tpu_custom_call.1} parent=1 // pred_region
      %211 = dma.done [#allocation18], 16
    $region97: #{tpu_custom_call.1} parent=1 // pred_fallthru
      _
    // Predicated region
    $region98: #{tpu_custom_call.1} parent=1 // pred_check
      _
    $region99: #{tpu_custom_call.1} parent=1 // pred_check_branch
      %213 = sbr.rel (0) target = $region101
    $region100: #{tpu_custom_call.1} parent=1 // pred_region
      %214 = dma.done [#allocation18], 2048
    $region101: #{tpu_custom_call.1} parent=1 // pred_fallthru
      _
    // Predicated region
    $region102: #{tpu_custom_call.1} parent=1 // pred_check
      _
    $region103: #{tpu_custom_call.1} parent=1 // pred_check_branch
      %216 = sbr.rel (0) target = $region105
    $region104: #{tpu_custom_call.1} parent=1 // pred_region
      %217 = dma.done [#allocation21], 16
    $region105: #{tpu_custom_call.1} parent=1 // pred_fallthru
      _
    // Predicated region
    $region106: #{tpu_custom_call.1} parent=1 // pred_check
      _
    $region107: #{tpu_custom_call.1} parent=1 // pred_check_branch
      %219 = sbr.rel (0) target = $region109
    $region108: #{tpu_custom_call.1} parent=1 // pred_region
      %220 = dma.done [#allocation21], 1024
    $region109: #{tpu_custom_call.1} parent=1 // pred_fallthru
      _
    // Predicated region
    $region110: #{tpu_custom_call.1} parent=1 // pred_check
      _
    $region111: #{tpu_custom_call.1} parent=1 // pred_check_branch
      %222 = sbr.rel (0) target = $region113
    $region112: #{tpu_custom_call.1} parent=1 // pred_region
      %223 = dma.done [#allocation24], 16
    $region113: #{tpu_custom_call.1} parent=1 // pred_fallthru
      _
    %v225 = vld [vmem:[#allocation2] sm:$0xff]
    %v226 = vld [vmem:[#allocation5] sm:$0xff]
    %v227 = vld [vmem:[#allocation5 + $0x8] sm:$0xff]
    %v228 = vld [vmem:[#allocation5 + $0x10] sm:$0xff]
    %v229 = vld [vmem:[#allocation5 + $0x18] sm:$0xff]
    %v230 = vld [vmem:[#allocation5 + $0x20] sm:$0xff]
    %v231 = vld [vmem:[#allocation5 + $0x28] sm:$0xff]
    %v232 = vld [vmem:[#allocation5 + $0x30] sm:$0xff]
    %v233 = vld [vmem:[#allocation5 + $0x38] sm:$0xff]
    %v234 = vpack.c.bf16 %v225, %v225
    %v235 = vpack.c.bf16 %v227, %v226
    %v236 = vpack.c.bf16 %v229, %v228
    %v237 = vpack.c.bf16 %v231, %v230
    %v238 = vpack.c.bf16 %v233, %v232
    %v239 = vld [vmem:[#allocation7] sm:$0xf]
    %v240 = vld [vmem:[#allocation7 + $0x4] sm:$0xf]
    %v241 = vld [vmem:[#allocation7 + $0x8] sm:$0xf]
    %v242 = vld [vmem:[#allocation7 + $0xc] sm:$0xf]
    %v243 = vld [vmem:[#allocation7 + $0x10] sm:$0xf]
    %v244 = vld [vmem:[#allocation7 + $0x14] sm:$0xf]
    %v245 = vld [vmem:[#allocation7 + $0x18] sm:$0xf]
    %v246 = vld [vmem:[#allocation7 + $0x1c] sm:$0xf]
    %v247 = vld [vmem:[#allocation8] sm:$0x1]
    %v249 = vlaneseq
    %v250 = vshrl.u32 %v249, 7
    %v251 = vsub.s32 0, %v250
    %v252 = vrot.slane %v247, %v251
    %v262 = vunpack.c.l.b16 %v239
    %v263 = vunpack.c.l.b16 %v240
    %v264 = vunpack.c.l.b16 %v241
    %v265 = vunpack.c.l.b16 %v242
    %v266 = vunpack.c.l.b16 %v243
    %v267 = vunpack.c.l.b16 %v244
    %v268 = vunpack.c.l.b16 %v245
    %v269 = vunpack.c.l.b16 %v246
    %v270 = vpack.c.b16 %v263, %v262
    %v271 = vpack.c.b16 %v265, %v264
    %v272 = vpack.c.b16 %v267, %v266
    %v273 = vpack.c.b16 %v269, %v268
    %vm278 = vcmask 523264
    %v280 = vsel %vm278, %v234, 0
    %282 = vmatprep.subr.bf16.mxu0 0
    %283 = vmatpush1.bf16.msra.mxu0 %v270
    %284 = vmatprep.subr.bf16.mxu0 0
    %285 = vmatpush1.bf16.msra.mxu0 %v271
    %286 = vmatprep.subr.bf16.mxu0 0
    %287 = vmatpush1.bf16.msra.mxu0 %v272
    %288 = vmatprep.subr.bf16.mxu0 0
    %289 = vmatpush1.bf16.msra.mxu0 %v273
    %290 = vmatprep.subr.bf16.mxu0 0
    %291 = vmatpush1.bf16.msra.mxu0 0
    %292 = vmatprep.subr.bf16.mxu0 0
    %293 = vmatpush1.bf16.msra.mxu0 0
    %294 = vmatprep.subr.bf16.mxu0 0
    %295 = vmatpush1.bf16.msra.mxu0 0
    %296 = vmatprep.subr.bf16.mxu0 0
    %297 = vmatpush1.bf16.msra.mxu0 0
    %298 = vmatprep.subr.bf16.mxu0 0
    %299 = vmatpush1.bf16.msra.mxu0 0
    %300 = vmatprep.subr.bf16.mxu0 0
    %301 = vmatpush1.bf16.msra.mxu0 0
    %302 = vmatprep.subr.bf16.mxu0 0
    %303 = vmatpush1.bf16.msra.mxu0 0
    %304 = vmatprep.subr.bf16.mxu0 0
    %305 = vmatpush1.bf16.msra.mxu0 0
    %306 = vmatprep.subr.bf16.mxu0 0
    %307 = vmatpush1.bf16.msra.mxu0 0
    %308 = vmatprep.subr.bf16.mxu0 0
    %309 = vmatpush1.bf16.msra.mxu0 0
    %310 = vmatprep.subr.bf16.mxu0 0
    %311 = vmatpush1.bf16.msra.mxu0 0
    %312 = vmatprep.subr.bf16.mxu0 0
    %313 = vmatpush1.bf16.msra.mxu0 0
    %314 = vmatprep.mubr.bf16.mxu0 0
    %315 = vmatmul.mubr.bf16.gmra.mrb[0].mxu0 %v280
    %v316 = vpop.f32.mrb[0].mxu0
    %v317 = vadd.f32 %v252, %v316
    %v318 = vpop.f32.mrb[0].mxu0
    %v319 = vpop.f32.mrb[0].mxu0
    %v320 = vpop.f32.mrb[0].mxu0
    %321 = vdwg.mxu0
    %v322 = vld [vmem:[#allocation10] sm:$0xf]
    %v323 = vld [vmem:[#allocation10 + $0x4] sm:$0xf]
    %v324 = vld [vmem:[#allocation10 + $0x8] sm:$0xf]
    %v325 = vld [vmem:[#allocation10 + $0xc] sm:$0xf]
    %v326 = vld [vmem:[#allocation10 + $0x10] sm:$0xf]
    %v327 = vld [vmem:[#allocation10 + $0x14] sm:$0xf]
    %v328 = vld [vmem:[#allocation10 + $0x18] sm:$0xf]
    %v329 = vld [vmem:[#allocation10 + $0x1c] sm:$0xf]
    %v330 = vld [vmem:[#allocation11] sm:$0x1]
    %v332 = vlaneseq
    %v333 = vshrl.u32 %v332, 7
    %v334 = vsub.s32 0, %v333
    %v335 = vrot.slane %v330, %v334
    %v345 = vunpack.c.l.b16 %v322
    %v346 = vunpack.c.l.b16 %v323
    %v347 = vunpack.c.l.b16 %v324
    %v348 = vunpack.c.l.b16 %v325
    %v349 = vunpack.c.l.b16 %v326
    %v350 = vunpack.c.l.b16 %v327
    %v351 = vunpack.c.l.b16 %v328
    %v352 = vunpack.c.l.b16 %v329
    %v353 = vpack.c.b16 %v346, %v345
    %v354 = vpack.c.b16 %v348, %v347
    %v355 = vpack.c.b16 %v350, %v349
    %v356 = vpack.c.b16 %v352, %v351
    %v362 = vsel %vm278, %v235, 0
    %v365 = vsel %vm278, %v236, 0
    %v368 = vsel %vm278, %v237, 0
    %v371 = vsel %vm278, %v238, 0
    %373 = vmatprep.subr.bf16.mxu0 0
    %374 = vmatpush1.bf16.msra.mxu0 %v353
    %375 = vmatprep.subr.bf16.mxu0 0
    %376 = vmatpush1.bf16.msra.mxu0 %v354
    %377 = vmatprep.subr.bf16.mxu0 0
    %378 = vmatpush1.bf16.msra.mxu0 %v355
    %379 = vmatprep.subr.bf16.mxu0 0
    %380 = vmatpush1.bf16.msra.mxu0 %v356
    %381 = vmatprep.subr.bf16.mxu0 0
    %382 = vmatpush1.bf16.msra.mxu0 0
    %383 = vmatprep.subr.bf16.mxu0 0
    %384 = vmatpush1.bf16.msra.mxu0 0
    %385 = vmatprep.subr.bf16.mxu0 0
    %386 = vmatpush1.bf16.msra.mxu0 0
    %387 = vmatprep.subr.bf16.mxu0 0
    %388 = vmatpush1.bf16.msra.mxu0 0
    %389 = vmatprep.subr.bf16.mxu0 0
    %390 = vmatpush1.bf16.msra.mxu0 0
    %391 = vmatprep.subr.bf16.mxu0 0
    %392 = vmatpush1.bf16.msra.mxu0 0
    %393 = vmatprep.subr.bf16.mxu0 0
    %394 = vmatpush1.bf16.msra.mxu0 0
    %395 = vmatprep.subr.bf16.mxu0 0
    %396 = vmatpush1.bf16.msra.mxu0 0
    %397 = vmatprep.subr.bf16.mxu0 0
    %398 = vmatpush1.bf16.msra.mxu0 0
    %399 = vmatprep.subr.bf16.mxu0 0
    %400 = vmatpush1.bf16.msra.mxu0 0
    %401 = vmatprep.subr.bf16.mxu0 0
    %402 = vmatpush1.bf16.msra.mxu0 0
    %403 = vmatprep.subr.bf16.mxu0 0
    %404 = vmatpush1.bf16.msra.mxu0 0
    %405 = vmatprep.mubr.bf16.mxu0 0
    %406 = vmatmul.mubr.bf16.gmra.mrb[0].mxu0 %v362
    %v407 = vpop.f32.mrb[0].mxu0
    %v408 = vadd.f32 %v335, %v407
    %v409 = vpop.f32.mrb[0].mxu0
    %v410 = vpop.f32.mrb[0].mxu0
    %v411 = vadd.f32 %v335, %v410
    %v412 = vpop.f32.mrb[0].mxu0
    %413 = vmatprep.mubr.bf16.mxu0 0
    %414 = vmatmul.mubr.bf16.gmra.mrb[0].mxu0 %v365
    %v415 = vpop.f32.mrb[0].mxu0
    %v416 = vadd.f32 %v335, %v415
    %v417 = vpop.f32.mrb[0].mxu0
    %v418 = vpop.f32.mrb[0].mxu0
    %v419 = vadd.f32 %v335, %v418
    %v420 = vpop.f32.mrb[0].mxu0
    %421 = vmatprep.mubr.bf16.mxu0 0
    %422 = vmatmul.mubr.bf16.gmra.mrb[0].mxu0 %v368
    %v423 = vpop.f32.mrb[0].mxu0
    %v424 = vadd.f32 %v335, %v423
    %v425 = vpop.f32.mrb[0].mxu0
    %v426 = vpop.f32.mrb[0].mxu0
    %v427 = vadd.f32 %v335, %v426
    %v428 = vpop.f32.mrb[0].mxu0
    %429 = vmatprep.mubr.bf16.mxu0 0
    %430 = vmatmul.mubr.bf16.gmra.mrb[0].mxu0 %v371
    %v431 = vpop.f32.mrb[0].mxu0
    %v432 = vadd.f32 %v335, %v431
    %v433 = vpop.f32.mrb[0].mxu0
    %v434 = vpop.f32.mrb[0].mxu0
    %v435 = vadd.f32 %v335, %v434
    %v436 = vpop.f32.mrb[0].mxu0
    %437 = vdwg.mxu0
    %v439 = vcombine.high %v317, %v317
    %v441 = vunpack.c.l.s4 1966171168
    %v442 = vunpack.c.0.s8 %v441
    %v443 = vlaneseq
    %v444 = vshrl.u32 %v443, 7
    %v445 = vsub.s32 %v442, %v444
    %v446 = vrot.slane %v317, %v445
    %v448 = vunpack.c.l.s4 1966171168
    %v449 = vunpack.c.0.s8 %v448
    %v450 = vlaneseq
    %v451 = vshrl.u32 %v450, 7
    %v452 = vsub.s32 %v449, %v451
    %v453 = vrot.slane %v439, %v452
    %v454 = vcombine.high %v446, %v446
    %v455 = vcombine.high %v453, %v453
    %v457 = vunpack.c.l.s4 1966171168
    %v458 = vunpack.c.0.s8 %v457
    %v459 = vlaneseq
    %v460 = vshrl.u32 %v459, 7
    %v461 = vsub.s32 %v458, %v460
    %v462 = vrot.slane %v446, %v461
    %v464 = vunpack.c.l.s4 1966171168
    %v465 = vunpack.c.0.s8 %v464
    %v466 = vlaneseq
    %v467 = vshrl.u32 %v466, 7
    %v468 = vsub.s32 %v465, %v467
    %v469 = vrot.slane %v453, %v468
    %v471 = vunpack.c.l.s4 1966171168
    %v472 = vunpack.c.0.s8 %v471
    %v473 = vlaneseq
    %v474 = vshrl.u32 %v473, 7
    %v475 = vsub.s32 %v472, %v474
    %v476 = vrot.slane %v454, %v475
    %v478 = vunpack.c.l.s4 1966171168
    %v479 = vunpack.c.0.s8 %v478
    %v480 = vlaneseq
    %v481 = vshrl.u32 %v480, 7
    %v482 = vsub.s32 %v479, %v481
    %v483 = vrot.slane %v455, %v482
    %v484 = vcombine.high %v462, %v462
    %v485 = vcombine.high %v469, %v469
    %v486 = vcombine.high %v476, %v476
    %v487 = vcombine.high %v483, %v483
    %v488 = vlaneseq
    %v489 = vshrl.u32 %v488, 7
    %v490 = vsub.s32 0, %v489
    %v491 = vrot.slane %v462, %v490
    %v492 = vlaneseq
    %v493 = vshrl.u32 %v492, 7
    %v494 = vsub.s32 0, %v493
    %v495 = vrot.slane %v476, %v494
    %v496 = vlaneseq
    %v497 = vshrl.u32 %v496, 7
    %v498 = vsub.s32 0, %v497
    %v499 = vrot.slane %v484, %v498
    %v500 = vlaneseq
    %v501 = vshrl.u32 %v500, 7
    %v502 = vsub.s32 0, %v501
    %v503 = vrot.slane %v486, %v502
    %v504 = vlaneseq
    %v505 = vshrl.u32 %v504, 7
    %v506 = vsub.s32 0, %v505
    %v507 = vrot.slane %v469, %v506
    %v508 = vlaneseq
    %v509 = vshrl.u32 %v508, 7
    %v510 = vsub.s32 0, %v509
    %v511 = vrot.slane %v483, %v510
    %v512 = vlaneseq
    %v513 = vshrl.u32 %v512, 7
    %v514 = vsub.s32 0, %v513
    %v515 = vrot.slane %v485, %v514
    %v516 = vlaneseq
    %v517 = vshrl.u32 %v516, 7
    %v518 = vsub.s32 0, %v517
    %v519 = vrot.slane %v487, %v518
    %v528 = vmul.f32 %v491, %v408
    %v529 = vmul.f32 %v495, %v411
    %v530 = vmul.f32 %v499, %v416
    %v531 = vmul.f32 %v503, %v419
    %v532 = vmul.f32 %v507, %v424
    %v533 = vmul.f32 %v511, %v427
    %v534 = vmul.f32 %v515, %v432
    %v535 = vmul.f32 %v519, %v435
    %v536 = vpack.c.bf16 %v529, %v528
    %v537 = vpack.c.bf16 %v531, %v530
    %v538 = vpack.c.bf16 %v533, %v532
    %v539 = vpack.c.bf16 %v535, %v534
    %v540 = vld [vmem:[#allocation13] sm:$0xf]
    %v541 = vld [vmem:[#allocation13 + $0x4] sm:$0xf]
    %v542 = vld [vmem:[#allocation13 + $0x8] sm:$0xf]
    %v543 = vld [vmem:[#allocation13 + $0xc] sm:$0xf]
    %v544 = vld [vmem:[#allocation13 + $0x10] sm:$0xf]
    %v545 = vld [vmem:[#allocation13 + $0x14] sm:$0xf]
    %v546 = vld [vmem:[#allocation13 + $0x18] sm:$0xf]
    %v547 = vld [vmem:[#allocation13 + $0x1c] sm:$0xf]
    %v548 = vld [vmem:[#allocation13 + $0x20] sm:$0xf]
    %v549 = vld [vmem:[#allocation13 + $0x24] sm:$0xf]
    %v550 = vld [vmem:[#allocation13 + $0x28] sm:$0xf]
    %v551 = vld [vmem:[#allocation13 + $0x2c] sm:$0xf]
    %v552 = vld [vmem:[#allocation13 + $0x30] sm:$0xf]
    %v553 = vld [vmem:[#allocation13 + $0x34] sm:$0xf]
    %v554 = vld [vmem:[#allocation13 + $0x38] sm:$0xf]
    %v555 = vld [vmem:[#allocation13 + $0x3c] sm:$0xf]
    %v572 = vunpack.c.l.b16 %v540
    %v573 = vunpack.c.l.b16 %v541
    %v574 = vunpack.c.l.b16 %v542
    %v575 = vunpack.c.l.b16 %v543
    %v576 = vunpack.c.l.b16 %v544
    %v577 = vunpack.c.l.b16 %v545
    %v578 = vunpack.c.l.b16 %v546
    %v579 = vunpack.c.l.b16 %v547
    %v580 = vunpack.c.l.b16 %v548
    %v581 = vunpack.c.l.b16 %v549
    %v582 = vunpack.c.l.b16 %v550
    %v583 = vunpack.c.l.b16 %v551
    %v584 = vunpack.c.l.b16 %v552
    %v585 = vunpack.c.l.b16 %v553
    %v586 = vunpack.c.l.b16 %v554
    %v587 = vunpack.c.l.b16 %v555
    %v588 = vpack.c.b16 %v573, %v572
    %v589 = vpack.c.b16 %v575, %v574
    %v590 = vpack.c.b16 %v577, %v576
    %v591 = vpack.c.b16 %v579, %v578
    %v592 = vpack.c.b16 %v581, %v580
    %v593 = vpack.c.b16 %v583, %v582
    %v594 = vpack.c.b16 %v585, %v584
    %v595 = vpack.c.b16 %v587, %v586
    %604 = vmatprep.subr.bf16.mxu0 0
    %605 = vmatpush1.bf16.msra.mxu0 %v588
    %606 = vmatprep.subr.bf16.mxu0 0
    %607 = vmatpush1.bf16.msra.mxu0 %v589
    %608 = vmatprep.subr.bf16.mxu0 0
    %609 = vmatpush1.bf16.msra.mxu0 %v590
    %610 = vmatprep.subr.bf16.mxu0 0
    %611 = vmatpush1.bf16.msra.mxu0 %v591
    %612 = vmatprep.subr.bf16.mxu0 0
    %613 = vmatpush1.bf16.msra.mxu0 %v592
    %614 = vmatprep.subr.bf16.mxu0 0
    %615 = vmatpush1.bf16.msra.mxu0 %v593
    %616 = vmatprep.subr.bf16.mxu0 0
    %617 = vmatpush1.bf16.msra.mxu0 %v594
    %618 = vmatprep.subr.bf16.mxu0 0
    %619 = vmatpush1.bf16.msra.mxu0 %v595
    %620 = vmatprep.subr.bf16.mxu0 0
    %621 = vmatpush1.bf16.msra.mxu0 0
    %622 = vmatprep.subr.bf16.mxu0 0
    %623 = vmatpush1.bf16.msra.mxu0 0
    %624 = vmatprep.subr.bf16.mxu0 0
    %625 = vmatpush1.bf16.msra.mxu0 0
    %626 = vmatprep.subr.bf16.mxu0 0
    %627 = vmatpush1.bf16.msra.mxu0 0
    %628 = vmatprep.subr.bf16.mxu0 0
    %629 = vmatpush1.bf16.msra.mxu0 0
    %630 = vmatprep.subr.bf16.mxu0 0
    %631 = vmatpush1.bf16.msra.mxu0 0
    %632 = vmatprep.subr.bf16.mxu0 0
    %633 = vmatpush1.bf16.msra.mxu0 0
    %634 = vmatprep.subr.bf16.mxu0 0
    %635 = vmatpush1.bf16.msra.mxu0 0
    %636 = vmatprep.mubr.bf16.mxu0 0
    %637 = vmatmul.mubr.bf16.gmra.mrb[0].mxu0 %v536
    %v638 = vpop.f32.mrb[0].mxu0
    %v639 = vadd.f32 0.0, %v638
    %v640 = vpop.f32.mrb[0].mxu0
    %v641 = vpop.f32.mrb[0].mxu0
    %v642 = vadd.f32 0.0, %v641
    %v643 = vpop.f32.mrb[0].mxu0
    %644 = vmatprep.mubr.bf16.mxu0 0
    %645 = vmatmul.mubr.bf16.gmra.mrb[0].mxu0 %v537
    %v646 = vpop.f32.mrb[0].mxu0
    %v647 = vadd.f32 0.0, %v646
    %v648 = vpop.f32.mrb[0].mxu0
    %v649 = vpop.f32.mrb[0].mxu0
    %v650 = vadd.f32 0.0, %v649
    %v651 = vpop.f32.mrb[0].mxu0
    %652 = vmatprep.mubr.bf16.mxu0 0
    %653 = vmatmul.mubr.bf16.gmra.mrb[0].mxu0 %v538
    %v654 = vpop.f32.mrb[0].mxu0
    %v655 = vadd.f32 0.0, %v654
    %v656 = vpop.f32.mrb[0].mxu0
    %v657 = vpop.f32.mrb[0].mxu0
    %v658 = vadd.f32 0.0, %v657
    %v659 = vpop.f32.mrb[0].mxu0
    %660 = vmatprep.mubr.bf16.mxu0 0
    %661 = vmatmul.mubr.bf16.gmra.mrb[0].mxu0 %v539
    %v662 = vpop.f32.mrb[0].mxu0
    %v663 = vadd.f32 0.0, %v662
    %v664 = vpop.f32.mrb[0].mxu0
    %v665 = vpop.f32.mrb[0].mxu0
    %v666 = vadd.f32 0.0, %v665
    %v667 = vpop.f32.mrb[0].mxu0
    %668 = vdwg.mxu0
    %vm669 = vcmask 64512
    %v670 = vsel %vm669, %v639, -inf
    %v671 = vrot.slane %v670, 4
    %v672 = vmax.f32 %v670, %v671
    %v673 = vrot.slane %v672, 2
    %v674 = vmax.f32 %v672, %v673
    %v675 = vrot.slane %v674, 1
    %v676 = vmax.f32 %v674, %v675
    %v677 = vsel %vm669, %v642, -inf
    %v678 = vrot.slane %v677, 4
    %v679 = vmax.f32 %v677, %v678
    %v680 = vrot.slane %v679, 2
    %v681 = vmax.f32 %v679, %v680
    %v682 = vrot.slane %v681, 1
    %v683 = vmax.f32 %v681, %v682
    %v684 = vsel %vm669, %v647, -inf
    %v685 = vrot.slane %v684, 4
    %v686 = vmax.f32 %v684, %v685
    %v687 = vrot.slane %v686, 2
    %v688 = vmax.f32 %v686, %v687
    %v689 = vrot.slane %v688, 1
    %v690 = vmax.f32 %v688, %v689
    %v691 = vsel %vm669, %v650, -inf
    %v692 = vrot.slane %v691, 4
    %v693 = vmax.f32 %v691, %v692
    %v694 = vrot.slane %v693, 2
    %v695 = vmax.f32 %v693, %v694
    %v696 = vrot.slane %v695, 1
    %v697 = vmax.f32 %v695, %v696
    %v698 = vsel %vm669, %v655, -inf
    %v699 = vrot.slane %v698, 4
    %v700 = vmax.f32 %v698, %v699
    %v701 = vrot.slane %v700, 2
    %v702 = vmax.f32 %v700, %v701
    %v703 = vrot.slane %v702, 1
    %v704 = vmax.f32 %v702, %v703
    %v705 = vsel %vm669, %v658, -inf
    %v706 = vrot.slane %v705, 4
    %v707 = vmax.f32 %v705, %v706
    %v708 = vrot.slane %v707, 2
    %v709 = vmax.f32 %v707, %v708
    %v710 = vrot.slane %v709, 1
    %v711 = vmax.f32 %v709, %v710
    %v712 = vsel %vm669, %v663, -inf
    %v713 = vrot.slane %v712, 4
    %v714 = vmax.f32 %v712, %v713
    %v715 = vrot.slane %v714, 2
    %v716 = vmax.f32 %v714, %v715
    %v717 = vrot.slane %v716, 1
    %v718 = vmax.f32 %v716, %v717
    %v719 = vsel %vm669, %v666, -inf
    %v720 = vrot.slane %v719, 4
    %v721 = vmax.f32 %v719, %v720
    %v722 = vrot.slane %v721, 2
    %v723 = vmax.f32 %v721, %v722
    %v724 = vrot.slane %v723, 1
    %v725 = vmax.f32 %v723, %v724
    %v726 = vsub.f32 %v639, %v676
    %v727 = vsub.f32 %v642, %v683
    %v728 = vsub.f32 %v647, %v690
    %v729 = vsub.f32 %v650, %v697
    %v730 = vsub.f32 %v655, %v704
    %v731 = vsub.f32 %v658, %v711
    %v732 = vsub.f32 %v663, %v718
    %v733 = vsub.f32 %v666, %v725
    %v734 = vmul.f32 %v726, 1.442695
    %v735 = vpow.pop %v734
    %v736 = vmul.f32 %v727, 1.442695
    %v737 = vpow.pop %v736
    %v738 = vmul.f32 %v728, 1.442695
    %v739 = vpow.pop %v738
    %v740 = vmul.f32 %v729, 1.442695
    %v741 = vpow.pop %v740
    %v742 = vmul.f32 %v730, 1.442695
    %v743 = vpow.pop %v742
    %v744 = vmul.f32 %v731, 1.442695
    %v745 = vpow.pop %v744
    %v746 = vmul.f32 %v732, 1.442695
    %v747 = vpow.pop %v746
    %v748 = vmul.f32 %v733, 1.442695
    %v749 = vpow.pop %v748
    %v750 = vsel %vm669, %v735, 0.0
    %v751 = vrot.slane %v750, 4
    %v752 = vadd.f32 %v750, %v751
    %v753 = vrot.slane %v752, 2
    %v754 = vadd.f32 %v752, %v753
    %v755 = vrot.slane %v754, 1
    %v756 = vadd.f32 %v754, %v755
    %v757 = vsel %vm669, %v737, 0.0
    %v758 = vrot.slane %v757, 4
    %v759 = vadd.f32 %v757, %v758
    %v760 = vrot.slane %v759, 2
    %v761 = vadd.f32 %v759, %v760
    %v762 = vrot.slane %v761, 1
    %v763 = vadd.f32 %v761, %v762
    %v764 = vsel %vm669, %v739, 0.0
    %v765 = vrot.slane %v764, 4
    %v766 = vadd.f32 %v764, %v765
    %v767 = vrot.slane %v766, 2
    %v768 = vadd.f32 %v766, %v767
    %v769 = vrot.slane %v768, 1
    %v770 = vadd.f32 %v768, %v769
    %v771 = vsel %vm669, %v741, 0.0
    %v772 = vrot.slane %v771, 4
    %v773 = vadd.f32 %v771, %v772
    %v774 = vrot.slane %v773, 2
    %v775 = vadd.f32 %v773, %v774
    %v776 = vrot.slane %v775, 1
    %v777 = vadd.f32 %v775, %v776
    %v778 = vsel %vm669, %v743, 0.0
    %v779 = vrot.slane %v778, 4
    %v780 = vadd.f32 %v778, %v779
    %v781 = vrot.slane %v780, 2
    %v782 = vadd.f32 %v780, %v781
    %v783 = vrot.slane %v782, 1
    %v784 = vadd.f32 %v782, %v783
    %v785 = vsel %vm669, %v745, 0.0
    %v786 = vrot.slane %v785, 4
    %v787 = vadd.f32 %v785, %v786
    %v788 = vrot.slane %v787, 2
    %v789 = vadd.f32 %v787, %v788
    %v790 = vrot.slane %v789, 1
    %v791 = vadd.f32 %v789, %v790
    %v792 = vsel %vm669, %v747, 0.0
    %v793 = vrot.slane %v792, 4
    %v794 = vadd.f32 %v792, %v793
    %v795 = vrot.slane %v794, 2
    %v796 = vadd.f32 %v794, %v795
    %v797 = vrot.slane %v796, 1
    %v798 = vadd.f32 %v796, %v797
    %v799 = vsel %vm669, %v749, 0.0
    %v800 = vrot.slane %v799, 4
    %v801 = vadd.f32 %v799, %v800
    %v802 = vrot.slane %v801, 2
    %v803 = vadd.f32 %v801, %v802
    %v804 = vrot.slane %v803, 1
    %v805 = vadd.f32 %v803, %v804
    %v806 = vrcp.pop %v756
    %v807 = vrcp.pop %v763
    %v808 = vrcp.pop %v770
    %v809 = vrcp.pop %v777
    %v810 = vrcp.pop %v784
    %v811 = vrcp.pop %v791
    %v812 = vrcp.pop %v798
    %v813 = vrcp.pop %v805
    %v814 = vmul.f32 %v735, %v806
    %v815 = vmul.f32 %v737, %v807
    %v816 = vmul.f32 %v739, %v808
    %v817 = vmul.f32 %v741, %v809
    %v818 = vmul.f32 %v743, %v810
    %v819 = vmul.f32 %v745, %v811
    %v820 = vmul.f32 %v747, %v812
    %v821 = vmul.f32 %v749, %v813
    %v822 = vpack.c.bf16 %v815, %v814
    %v823 = vpack.c.bf16 %v817, %v816
    %v824 = vpack.c.bf16 %v819, %v818
    %v825 = vpack.c.bf16 %v821, %v820
    %v826 = vld [vmem:[#allocation14] sm:$0xf]
    %v828 = vsel %vm669, %v822, 0
    %v831 = vsel %vm669, %v823, 0
    %v834 = vsel %vm669, %v824, 0
    %v837 = vsel %vm669, %v825, 0
    %vm839 = vcmask 1043456
    %v841 = vsel %vm839, %v826, 0
    %843 = vmatprep.subr.bf16.mxu0 0
    %844 = vmatpush1.bf16.msra.mxu0 %v841
    %845 = vmatprep.subr.bf16.mxu0 0
    %846 = vmatpush1.bf16.msra.mxu0 0
    %847 = vmatprep.subr.bf16.mxu0 0
    %848 = vmatpush1.bf16.msra.mxu0 0
    %849 = vmatprep.subr.bf16.mxu0 0
    %850 = vmatpush1.bf16.msra.mxu0 0
    %851 = vmatprep.subr.bf16.mxu0 0
    %852 = vmatpush1.bf16.msra.mxu0 0
    %853 = vmatprep.subr.bf16.mxu0 0
    %854 = vmatpush1.bf16.msra.mxu0 0
    %855 = vmatprep.subr.bf16.mxu0 0
    %856 = vmatpush1.bf16.msra.mxu0 0
    %857 = vmatprep.subr.bf16.mxu0 0
    %858 = vmatpush1.bf16.msra.mxu0 0
    %859 = vmatprep.subr.bf16.mxu0 0
    %860 = vmatpush1.bf16.msra.mxu0 0
    %861 = vmatprep.subr.bf16.mxu0 0
    %862 = vmatpush1.bf16.msra.mxu0 0
    %863 = vmatprep.subr.bf16.mxu0 0
    %864 = vmatpush1.bf16.msra.mxu0 0
    %865 = vmatprep.subr.bf16.mxu0 0
    %866 = vmatpush1.bf16.msra.mxu0 0
    %867 = vmatprep.subr.bf16.mxu0 0
    %868 = vmatpush1.bf16.msra.mxu0 0
    %869 = vmatprep.subr.bf16.mxu0 0
    %870 = vmatpush1.bf16.msra.mxu0 0
    %871 = vmatprep.subr.bf16.mxu0 0
    %872 = vmatpush1.bf16.msra.mxu0 0
    %873 = vmatprep.subr.bf16.mxu0 0
    %874 = vmatpush1.bf16.msra.mxu0 0
    %875 = vmatprep.mubr.bf16.mxu0 0
    %876 = vmatmul.mubr.bf16.gmra.mrb[0].mxu0 %v828
    %v877 = vpop.f32.mrb[0].mxu0
    %v878 = vadd.f32 0.0, %v877
    %v879 = vpop.f32.mrb[0].mxu0
    %v880 = vpop.f32.mrb[0].mxu0
    %v881 = vadd.f32 0.0, %v880
    %v882 = vpop.f32.mrb[0].mxu0
    %883 = vmatprep.mubr.bf16.mxu0 0
    %884 = vmatmul.mubr.bf16.gmra.mrb[0].mxu0 %v831
    %v885 = vpop.f32.mrb[0].mxu0
    %v886 = vadd.f32 0.0, %v885
    %v887 = vpop.f32.mrb[0].mxu0
    %v888 = vpop.f32.mrb[0].mxu0
    %v889 = vadd.f32 0.0, %v888
    %v890 = vpop.f32.mrb[0].mxu0
    %891 = vmatprep.mubr.bf16.mxu0 0
    %892 = vmatmul.mubr.bf16.gmra.mrb[0].mxu0 %v834
    %v893 = vpop.f32.mrb[0].mxu0
    %v894 = vadd.f32 0.0, %v893
    %v895 = vpop.f32.mrb[0].mxu0
    %v896 = vpop.f32.mrb[0].mxu0
    %v897 = vadd.f32 0.0, %v896
    %v898 = vpop.f32.mrb[0].mxu0
    %899 = vmatprep.mubr.bf16.mxu0 0
    %900 = vmatmul.mubr.bf16.gmra.mrb[0].mxu0 %v837
    %v901 = vpop.f32.mrb[0].mxu0
    %v902 = vadd.f32 0.0, %v901
    %v903 = vpop.f32.mrb[0].mxu0
    %v904 = vpop.f32.mrb[0].mxu0
    %v905 = vadd.f32 0.0, %v904
    %v906 = vpop.f32.mrb[0].mxu0
    %907 = vdwg.mxu0
    %v908 = vmul.f32 %v878, %v408
    %v909 = vmul.f32 %v881, %v411
    %v910 = vmul.f32 %v886, %v416
    %v911 = vmul.f32 %v889, %v419
    %v912 = vmul.f32 %v894, %v424
    %v913 = vmul.f32 %v897, %v427
    %v914 = vmul.f32 %v902, %v432
    %v915 = vmul.f32 %v905, %v435
    %v916 = vrot.slane %v908, 4
    %v917 = vadd.f32 %v908, %v916
    %v918 = vrot.slane %v917, 2
    %v919 = vadd.f32 %v917, %v918
    %v920 = vrot.slane %v919, 1
    %v921 = vadd.f32 %v919, %v920
    %v922 = vrot.slane %v909, 4
    %v923 = vadd.f32 %v909, %v922
    %v924 = vrot.slane %v923, 2
    %v925 = vadd.f32 %v923, %v924
    %v926 = vrot.slane %v925, 1
    %v927 = vadd.f32 %v925, %v926
    %v928 = vrot.slane %v910, 4
    %v929 = vadd.f32 %v910, %v928
    %v930 = vrot.slane %v929, 2
    %v931 = vadd.f32 %v929, %v930
    %v932 = vrot.slane %v931, 1
    %v933 = vadd.f32 %v931, %v932
    %v934 = vrot.slane %v911, 4
    %v935 = vadd.f32 %v911, %v934
    %v936 = vrot.slane %v935, 2
    %v937 = vadd.f32 %v935, %v936
    %v938 = vrot.slane %v937, 1
    %v939 = vadd.f32 %v937, %v938
    %v940 = vrot.slane %v912, 4
    %v941 = vadd.f32 %v912, %v940
    %v942 = vrot.slane %v941, 2
    %v943 = vadd.f32 %v941, %v942
    %v944 = vrot.slane %v943, 1
    %v945 = vadd.f32 %v943, %v944
    %v946 = vrot.slane %v913, 4
    %v947 = vadd.f32 %v913, %v946
    %v948 = vrot.slane %v947, 2
    %v949 = vadd.f32 %v947, %v948
    %v950 = vrot.slane %v949, 1
    %v951 = vadd.f32 %v949, %v950
    %v952 = vrot.slane %v914, 4
    %v953 = vadd.f32 %v914, %v952
    %v954 = vrot.slane %v953, 2
    %v955 = vadd.f32 %v953, %v954
    %v956 = vrot.slane %v955, 1
    %v957 = vadd.f32 %v955, %v956
    %v958 = vrot.slane %v915, 4
    %v959 = vadd.f32 %v915, %v958
    %v960 = vrot.slane %v959, 2
    %v961 = vadd.f32 %v959, %v960
    %v962 = vrot.slane %v961, 1
    %v963 = vadd.f32 %v961, %v962
    %v964 = vpack.c.bf16 %v921, %v921
    %v965 = vpack.c.bf16 %v927, %v927
    %v966 = vpack.c.bf16 %v933, %v933
    %v967 = vpack.c.bf16 %v939, %v939
    %v968 = vpack.c.bf16 %v945, %v945
    %v969 = vpack.c.bf16 %v951, %v951
    %v970 = vpack.c.bf16 %v957, %v957
    %v971 = vpack.c.bf16 %v963, %v963
    %v972 = vld [vmem:[#allocation16] sm:$0xf]
    %v973 = vld [vmem:[#allocation16 + $0x4] sm:$0xf]
    %v974 = vld [vmem:[#allocation16 + $0x8] sm:$0xf]
    %v975 = vld [vmem:[#allocation16 + $0xc] sm:$0xf]
    %v976 = vld [vmem:[#allocation16 + $0x10] sm:$0xf]
    %v977 = vld [vmem:[#allocation16 + $0x14] sm:$0xf]
    %v978 = vld [vmem:[#allocation16 + $0x18] sm:$0xf]
    %v979 = vld [vmem:[#allocation16 + $0x1c] sm:$0xf]
    %v980 = vld [vmem:[#allocation16 + $0x20] sm:$0xf]
    %v981 = vld [vmem:[#allocation16 + $0x24] sm:$0xf]
    %v982 = vld [vmem:[#allocation16 + $0x28] sm:$0xf]
    %v983 = vld [vmem:[#allocation16 + $0x2c] sm:$0xf]
    %v984 = vld [vmem:[#allocation16 + $0x30] sm:$0xf]
    %v985 = vld [vmem:[#allocation16 + $0x34] sm:$0xf]
    %v986 = vld [vmem:[#allocation16 + $0x38] sm:$0xf]
    %v987 = vld [vmem:[#allocation16 + $0x3c] sm:$0xf]
    %v988 = vld [vmem:[#allocation17] sm:$0x1]
    %v990 = vlaneseq
    %v991 = vshrl.u32 %v990, 7
    %v992 = vsub.s32 0, %v991
    %v993 = vrot.slane %v988, %v992
    %v1003 = vunpack.c.l.b16 %v964
    %v1004 = vunpack.c.l.b16 %v965
    %v1005 = vunpack.c.l.b16 %v966
    %v1006 = vunpack.c.l.b16 %v967
    %v1007 = vunpack.c.l.b16 %v968
    %v1008 = vunpack.c.l.b16 %v969
    %v1009 = vunpack.c.l.b16 %v970
    %v1010 = vunpack.c.l.b16 %v971
    %vm1011 = vcmask 1041409
    %v1012 = vsel %vm1011, %v1004, %v1003
    %vm1013 = vcmask 1042434
    %v1014 = vsel %vm1013, %v1005, %v1012
    %vm1015 = vcmask 1043459
    %v1016 = vsel %vm1015, %v1006, %v1014
    %vm1017 = vcmask 1044484
    %v1018 = vsel %vm1017, %v1007, %v1016
    %vm1019 = vcmask 1045509
    %v1020 = vsel %vm1019, %v1008, %v1018
    %vm1021 = vcmask 1046534
    %v1022 = vsel %vm1021, %v1009, %v1020
    %vm1023 = vcmask 1047559
    %v1024 = vsel %vm1023, %v1010, %v1022
    %v1025 = vpack.c.b16 %v1024, %v1024
    %v1043 = vunpack.c.l.b16 %v972
    %v1044 = vunpack.c.l.b16 %v973
    %v1045 = vunpack.c.l.b16 %v974
    %v1046 = vunpack.c.l.b16 %v975
    %v1047 = vunpack.c.l.b16 %v976
    %v1048 = vunpack.c.l.b16 %v977
    %v1049 = vunpack.c.l.b16 %v978
    %v1050 = vunpack.c.l.b16 %v979
    %v1051 = vunpack.c.l.b16 %v980
    %v1052 = vunpack.c.l.b16 %v981
    %v1053 = vunpack.c.l.b16 %v982
    %v1054 = vunpack.c.l.b16 %v983
    %v1055 = vunpack.c.l.b16 %v984
    %v1056 = vunpack.c.l.b16 %v985
    %v1057 = vunpack.c.l.b16 %v986
    %v1058 = vunpack.c.l.b16 %v987
    %v1059 = vpack.c.b16 %v1044, %v1043
    %v1060 = vpack.c.b16 %v1046, %v1045
    %v1061 = vpack.c.b16 %v1048, %v1047
    %v1062 = vpack.c.b16 %v1050, %v1049
    %v1063 = vpack.c.b16 %v1052, %v1051
    %v1064 = vpack.c.b16 %v1054, %v1053
    %v1065 = vpack.c.b16 %v1056, %v1055
    %v1066 = vpack.c.b16 %v1058, %v1057
    %1075 = vmatprep.subr.bf16.mxu0 0
    %1076 = vmatpush1.bf16.msra.mxu0 %v1059
    %1077 = vmatprep.subr.bf16.mxu0 0
    %1078 = vmatpush1.bf16.msra.mxu0 %v1060
    %1079 = vmatprep.subr.bf16.mxu0 0
    %1080 = vmatpush1.bf16.msra.mxu0 %v1061
    %1081 = vmatprep.subr.bf16.mxu0 0
    %1082 = vmatpush1.bf16.msra.mxu0 %v1062
    %1083 = vmatprep.subr.bf16.mxu0 0
    %1084 = vmatpush1.bf16.msra.mxu0 %v1063
    %1085 = vmatprep.subr.bf16.mxu0 0
    %1086 = vmatpush1.bf16.msra.mxu0 %v1064
    %1087 = vmatprep.subr.bf16.mxu0 0
    %1088 = vmatpush1.bf16.msra.mxu0 %v1065
    %1089 = vmatprep.subr.bf16.mxu0 0
    %1090 = vmatpush1.bf16.msra.mxu0 %v1066
    %1091 = vmatprep.subr.bf16.mxu0 0
    %1092 = vmatpush1.bf16.msra.mxu0 0
    %1093 = vmatprep.subr.bf16.mxu0 0
    %1094 = vmatpush1.bf16.msra.mxu0 0
    %1095 = vmatprep.subr.bf16.mxu0 0
    %1096 = vmatpush1.bf16.msra.mxu0 0
    %1097 = vmatprep.subr.bf16.mxu0 0
    %1098 = vmatpush1.bf16.msra.mxu0 0
    %1099 = vmatprep.subr.bf16.mxu0 0
    %1100 = vmatpush1.bf16.msra.mxu0 0
    %1101 = vmatprep.subr.bf16.mxu0 0
    %1102 = vmatpush1.bf16.msra.mxu0 0
    %1103 = vmatprep.subr.bf16.mxu0 0
    %1104 = vmatpush1.bf16.msra.mxu0 0
    %1105 = vmatprep.subr.bf16.mxu0 0
    %1106 = vmatpush1.bf16.msra.mxu0 0
    %1107 = vmatprep.mubr.bf16.mxu0 0
    %1108 = vmatmul.mubr.bf16.gmra.mrb[0].mxu0 %v1025
    %v1109 = vpop.f32.mrb[0].mxu0
    %v1110 = vadd.f32 %v993, %v1109
    %v1111 = vpop.f32.mrb[0].mxu0
    %v1112 = vpop.f32.mrb[0].mxu0
    %v1113 = vpop.f32.mrb[0].mxu0
    %1114 = vdwg.mxu0
    %v1115 = vsub.f32 %v225, %v1110
    %v1116 = vand.u32 2147483647, %v1115
    %v1117 = vmul.f32 %v225, %v1110
    %1119 = vrot.lane.b32.xlu0 %v1110, 64
    %v1120 = vpop.permute.xlu0 %1119
    %1123 = vrot.lane.b32.xlu0 %v1117, 64
    %v1124 = vpop.permute.xlu0 %1123
    %v1126 = vsel %vm278, %v225, %v1120
    %v1127 = vsel %vm278, %v1116, %v1124
    %v1128 = vpack.c.bf16 %v1126, %v1126
    %v1129 = vpack.c.bf16 %v1127, %v1127
    %v1130 = vld [vmem:[#allocation19] sm:$0xf]
    %v1131 = vld [vmem:[#allocation19 + $0x4] sm:$0xf]
    %v1132 = vld [vmem:[#allocation19 + $0x8] sm:$0xf]
    %v1133 = vld [vmem:[#allocation19 + $0xc] sm:$0xf]
    %v1134 = vld [vmem:[#allocation19 + $0x10] sm:$0xf]
    %v1135 = vld [vmem:[#allocation19 + $0x14] sm:$0xf]
    %v1136 = vld [vmem:[#allocation19 + $0x18] sm:$0xf]
    %v1137 = vld [vmem:[#allocation19 + $0x1c] sm:$0xf]
    %v1138 = vld [vmem:[#allocation19 + $0x20] sm:$0xf]
    %v1139 = vld [vmem:[#allocation19 + $0x24] sm:$0xf]
    %v1140 = vld [vmem:[#allocation19 + $0x28] sm:$0xf]
    %v1141 = vld [vmem:[#allocation19 + $0x2c] sm:$0xf]
    %v1142 = vld [vmem:[#allocation19 + $0x30] sm:$0xf]
    %v1143 = vld [vmem:[#allocation19 + $0x34] sm:$0xf]
    %v1144 = vld [vmem:[#allocation19 + $0x38] sm:$0xf]
    %v1145 = vld [vmem:[#allocation19 + $0x3c] sm:$0xf]
    %v1146 = vld [vmem:[#allocation19 + $0x40] sm:$0xf]
    %v1147 = vld [vmem:[#allocation19 + $0x44] sm:$0xf]
    %v1148 = vld [vmem:[#allocation19 + $0x48] sm:$0xf]
    %v1149 = vld [vmem:[#allocation19 + $0x4c] sm:$0xf]
    %v1150 = vld [vmem:[#allocation19 + $0x50] sm:$0xf]
    %v1151 = vld [vmem:[#allocation19 + $0x54] sm:$0xf]
    %v1152 = vld [vmem:[#allocation19 + $0x58] sm:$0xf]
    %v1153 = vld [vmem:[#allocation19 + $0x5c] sm:$0xf]
    %v1154 = vld [vmem:[#allocation19 + $0x60] sm:$0xf]
    %v1155 = vld [vmem:[#allocation19 + $0x64] sm:$0xf]
    %v1156 = vld [vmem:[#allocation19 + $0x68] sm:$0xf]
    %v1157 = vld [vmem:[#allocation19 + $0x6c] sm:$0xf]
    %v1158 = vld [vmem:[#allocation19 + $0x70] sm:$0xf]
    %v1159 = vld [vmem:[#allocation19 + $0x74] sm:$0xf]
    %v1160 = vld [vmem:[#allocation19 + $0x78] sm:$0xf]
    %v1161 = vld [vmem:[#allocation19 + $0x7c] sm:$0xf]
    %v1162 = vld [vmem:[#allocation20] sm:$0x1]
    %v1164 = vlaneseq
    %v1165 = vshrl.u32 %v1164, 7
    %v1166 = vsub.s32 0, %v1165
    %v1167 = vrot.slane %v1162, %v1166
    %v1201 = vunpack.c.l.b16 %v1130
    %v1202 = vunpack.c.l.b16 %v1131
    %v1203 = vunpack.c.l.b16 %v1132
    %v1204 = vunpack.c.l.b16 %v1133
    %v1205 = vunpack.c.l.b16 %v1134
    %v1206 = vunpack.c.l.b16 %v1135
    %v1207 = vunpack.c.l.b16 %v1136
    %v1208 = vunpack.c.l.b16 %v1137
    %v1209 = vunpack.c.l.b16 %v1138
    %v1210 = vunpack.c.l.b16 %v1139
    %v1211 = vunpack.c.l.b16 %v1140
    %v1212 = vunpack.c.l.b16 %v1141
    %v1213 = vunpack.c.l.b16 %v1142
    %v1214 = vunpack.c.l.b16 %v1143
    %v1215 = vunpack.c.l.b16 %v1144
    %v1216 = vunpack.c.l.b16 %v1145
    %v1217 = vunpack.c.l.b16 %v1146
    %v1218 = vunpack.c.l.b16 %v1147
    %v1219 = vunpack.c.l.b16 %v1148
    %v1220 = vunpack.c.l.b16 %v1149
    %v1221 = vunpack.c.l.b16 %v1150
    %v1222 = vunpack.c.l.b16 %v1151
    %v1223 = vunpack.c.l.b16 %v1152
    %v1224 = vunpack.c.l.b16 %v1153
    %v1225 = vunpack.c.l.b16 %v1154
    %v1226 = vunpack.c.l.b16 %v1155
    %v1227 = vunpack.c.l.b16 %v1156
    %v1228 = vunpack.c.l.b16 %v1157
    %v1229 = vunpack.c.l.b16 %v1158
    %v1230 = vunpack.c.l.b16 %v1159
    %v1231 = vunpack.c.l.b16 %v1160
    %v1232 = vunpack.c.l.b16 %v1161
    %v1233 = vpack.c.b16 %v1202, %v1201
    %v1234 = vpack.c.b16 %v1204, %v1203
    %v1235 = vpack.c.b16 %v1206, %v1205
    %v1236 = vpack.c.b16 %v1208, %v1207
    %v1237 = vpack.c.b16 %v1210, %v1209
    %v1238 = vpack.c.b16 %v1212, %v1211
    %v1239 = vpack.c.b16 %v1214, %v1213
    %v1240 = vpack.c.b16 %v1216, %v1215
    %v1241 = vpack.c.b16 %v1218, %v1217
    %v1242 = vpack.c.b16 %v1220, %v1219
    %v1243 = vpack.c.b16 %v1222, %v1221
    %v1244 = vpack.c.b16 %v1224, %v1223
    %v1245 = vpack.c.b16 %v1226, %v1225
    %v1246 = vpack.c.b16 %v1228, %v1227
    %v1247 = vpack.c.b16 %v1230, %v1229
    %v1248 = vpack.c.b16 %v1232, %v1231
    %1265 = vmatprep.subr.bf16.mxu0 0
    %1266 = vmatpush1.bf16.msra.mxu0 %v1233
    %1267 = vmatprep.subr.bf16.mxu0 0
    %1268 = vmatpush1.bf16.msra.mxu0 %v1234
    %1269 = vmatprep.subr.bf16.mxu0 0
    %1270 = vmatpush1.bf16.msra.mxu0 %v1235
    %1271 = vmatprep.subr.bf16.mxu0 0
    %1272 = vmatpush1.bf16.msra.mxu0 %v1236
    %1273 = vmatprep.subr.bf16.mxu0 0
    %1274 = vmatpush1.bf16.msra.mxu0 %v1237
    %1275 = vmatprep.subr.bf16.mxu0 0
    %1276 = vmatpush1.bf16.msra.mxu0 %v1238
    %1277 = vmatprep.subr.bf16.mxu0 0
    %1278 = vmatpush1.bf16.msra.mxu0 %v1239
    %1279 = vmatprep.subr.bf16.mxu0 0
    %1280 = vmatpush1.bf16.msra.mxu0 %v1240
    %1281 = vmatprep.subr.bf16.mxu0 0
    %1282 = vmatpush1.bf16.msra.mxu0 %v1241
    %1283 = vmatprep.subr.bf16.mxu0 0
    %1284 = vmatpush1.bf16.msra.mxu0 %v1242
    %1285 = vmatprep.subr.bf16.mxu0 0
    %1286 = vmatpush1.bf16.msra.mxu0 %v1243
    %1287 = vmatprep.subr.bf16.mxu0 0
    %1288 = vmatpush1.bf16.msra.mxu0 %v1244
    %1289 = vmatprep.subr.bf16.mxu0 0
    %1290 = vmatpush1.bf16.msra.mxu0 %v1245
    %1291 = vmatprep.subr.bf16.mxu0 0
    %1292 = vmatpush1.bf16.msra.mxu0 %v1246
    %1293 = vmatprep.subr.bf16.mxu0 0
    %1294 = vmatpush1.bf16.msra.mxu0 %v1247
    %1295 = vmatprep.subr.bf16.mxu0 0
    %1296 = vmatpush1.bf16.msra.mxu0 %v1248
    %1297 = vmatprep.mubr.bf16.mxu0 %v1129
    %1298 = vmatmul.mubr.bf16.gmra.mrb[0].mxu0 %v1128
    %v1299 = vpop.f32.mrb[0].mxu0
    %v1300 = vadd.f32 %v1167, %v1299
    %v1301 = vpop.f32.mrb[0].mxu0
    %v1302 = vpop.f32.mrb[0].mxu0
    %v1303 = vpop.f32.mrb[0].mxu0
    %1304 = vdwg.mxu0
    %v1305 = vmax.f32 %v1300, 0.0
    %v1306 = vpack.c.bf16 %v1305, %v1305
    %v1307 = vld [vmem:[#allocation22] sm:$0xf]
    %v1308 = vld [vmem:[#allocation22 + $0x4] sm:$0xf]
    %v1309 = vld [vmem:[#allocation22 + $0x8] sm:$0xf]
    %v1310 = vld [vmem:[#allocation22 + $0xc] sm:$0xf]
    %v1311 = vld [vmem:[#allocation22 + $0x10] sm:$0xf]
    %v1312 = vld [vmem:[#allocation22 + $0x14] sm:$0xf]
    %v1313 = vld [vmem:[#allocation22 + $0x18] sm:$0xf]
    %v1314 = vld [vmem:[#allocation22 + $0x1c] sm:$0xf]
    %v1315 = vld [vmem:[#allocation22 + $0x20] sm:$0xf]
    %v1316 = vld [vmem:[#allocation22 + $0x24] sm:$0xf]
    %v1317 = vld [vmem:[#allocation22 + $0x28] sm:$0xf]
    %v1318 = vld [vmem:[#allocation22 + $0x2c] sm:$0xf]
    %v1319 = vld [vmem:[#allocation22 + $0x30] sm:$0xf]
    %v1320 = vld [vmem:[#allocation22 + $0x34] sm:$0xf]
    %v1321 = vld [vmem:[#allocation22 + $0x38] sm:$0xf]
    %v1322 = vld [vmem:[#allocation22 + $0x3c] sm:$0xf]
    %v1323 = vld [vmem:[#allocation23] sm:$0x1]
    %v1325 = vlaneseq
    %v1326 = vshrl.u32 %v1325, 7
    %v1327 = vsub.s32 0, %v1326
    %v1328 = vrot.slane %v1323, %v1327
    %v1346 = vunpack.c.l.b16 %v1307
    %v1347 = vunpack.c.l.b16 %v1308
    %v1348 = vunpack.c.l.b16 %v1309
    %v1349 = vunpack.c.l.b16 %v1310
    %v1350 = vunpack.c.l.b16 %v1311
    %v1351 = vunpack.c.l.b16 %v1312
    %v1352 = vunpack.c.l.b16 %v1313
    %v1353 = vunpack.c.l.b16 %v1314
    %v1354 = vunpack.c.l.b16 %v1315
    %v1355 = vunpack.c.l.b16 %v1316
    %v1356 = vunpack.c.l.b16 %v1317
    %v1357 = vunpack.c.l.b16 %v1318
    %v1358 = vunpack.c.l.b16 %v1319
    %v1359 = vunpack.c.l.b16 %v1320
    %v1360 = vunpack.c.l.b16 %v1321
    %v1361 = vunpack.c.l.b16 %v1322
    %v1362 = vpack.c.b16 %v1347, %v1346
    %v1363 = vpack.c.b16 %v1349, %v1348
    %v1364 = vpack.c.b16 %v1351, %v1350
    %v1365 = vpack.c.b16 %v1353, %v1352
    %v1366 = vpack.c.b16 %v1355, %v1354
    %v1367 = vpack.c.b16 %v1357, %v1356
    %v1368 = vpack.c.b16 %v1359, %v1358
    %v1369 = vpack.c.b16 %v1361, %v1360
    %1378 = vmatprep.subr.bf16.mxu0 0
    %1379 = vmatpush1.bf16.msra.mxu0 %v1362
    %1380 = vmatprep.subr.bf16.mxu0 0
    %1381 = vmatpush1.bf16.msra.mxu0 %v1363
    %1382 = vmatprep.subr.bf16.mxu0 0
    %1383 = vmatpush1.bf16.msra.mxu0 %v1364
    %1384 = vmatprep.subr.bf16.mxu0 0
    %1385 = vmatpush1.bf16.msra.mxu0 %v1365
    %1386 = vmatprep.subr.bf16.mxu0 0
    %1387 = vmatpush1.bf16.msra.mxu0 %v1366
    %1388 = vmatprep.subr.bf16.mxu0 0
    %1389 = vmatpush1.bf16.msra.mxu0 %v1367
    %1390 = vmatprep.subr.bf16.mxu0 0
    %1391 = vmatpush1.bf16.msra.mxu0 %v1368
    %1392 = vmatprep.subr.bf16.mxu0 0
    %1393 = vmatpush1.bf16.msra.mxu0 %v1369
    %1394 = vmatprep.subr.bf16.mxu0 0
    %1395 = vmatpush1.bf16.msra.mxu0 0
    %1396 = vmatprep.subr.bf16.mxu0 0
    %1397 = vmatpush1.bf16.msra.mxu0 0
    %1398 = vmatprep.subr.bf16.mxu0 0
    %1399 = vmatpush1.bf16.msra.mxu0 0
    %1400 = vmatprep.subr.bf16.mxu0 0
    %1401 = vmatpush1.bf16.msra.mxu0 0
    %1402 = vmatprep.subr.bf16.mxu0 0
    %1403 = vmatpush1.bf16.msra.mxu0 0
    %1404 = vmatprep.subr.bf16.mxu0 0
    %1405 = vmatpush1.bf16.msra.mxu0 0
    %1406 = vmatprep.subr.bf16.mxu0 0
    %1407 = vmatpush1.bf16.msra.mxu0 0
    %1408 = vmatprep.subr.bf16.mxu0 0
    %1409 = vmatpush1.bf16.msra.mxu0 0
    %1410 = vmatprep.mubr.bf16.mxu0 0
    %1411 = vmatmul.mubr.bf16.gmra.mrb[0].mxu0 %v1306
    %v1412 = vpop.f32.mrb[0].mxu0
    %v1413 = vadd.f32 %v1328, %v1412
    %v1414 = vpop.f32.mrb[0].mxu0
    %v1415 = vpop.f32.mrb[0].mxu0
    %v1416 = vpop.f32.mrb[0].mxu0
    %1417 = vdwg.mxu0
    %1418 = vst [vmem:[#allocation25] sm:$0xff] %v1413
    // Predicated region
    $region114: #{tpu_custom_call.1} parent=1 // pred_check
      _
    $region115: #{tpu_custom_call.1} parent=1 // pred_check_branch
      %1420 = sbr.rel (0) target = $region117
    $region116: #{tpu_custom_call.1} parent=1 // pred_region
      %s1422 = ssub.s32 128, 128
      %1423 = vsyncadd [#allocation4], %s1422
      %s1425 = sshll.u32 [#allocation25], 4
      %s1426 = int_to_ptr.vmem [resolvable:$true] %s1425
      %1428 = dma.vmem_to_hbm [thread:$0]  %s1426, 128, %s14, [#allocation4]
    $region117: #{tpu_custom_call.1} parent=1 // pred_fallthru
      _
    // Predicated region
    $region118: #{tpu_custom_call.1} parent=1 // pred_check
      _
    $region119: #{tpu_custom_call.1} parent=1 // pred_check_branch
      %1430 = sbr.rel (0) target = $region121
    $region120: #{tpu_custom_call.1} parent=1 // pred_region
      %1431 = dma.done [#allocation4], 128
    $region121: #{tpu_custom_call.1} parent=1 // pred_fallthru
      _
    %1432 = vsyncpa [#allocation3], 1
    %1433 = vsyncpa [#allocation6], 1
    %1434 = vsyncpa [#allocation9], 1
    %1435 = vsyncpa [#allocation12], 1
    %1436 = vsyncpa [#allocation15], 1
    %1437 = vsyncpa [#allocation18], 1
    %1438 = vsyncpa [#allocation21], 1
    %1439 = vsyncpa [#allocation24], 1
    %1440 = vsyncpa [#allocation4], 1

</llo_original>
